<compile_context>
chip_gen: v7x
topology: tpu7x:2x2x1
jax: 0.10.0
libtpu: 0.0.40
codegen_flags: <defaults>
</compile_context>

<pallas_src>
import functools

import jax
import jax.numpy as jnp
from jax import lax
from jax.experimental import pallas as pl
from jax.experimental.pallas import tpu as pltpu

NEG_SLOPE = 0.01  # torch.nn.LeakyReLU default


def _lrelu_f32(x):
    return jnp.where(x > 0, x, NEG_SLOPE * x)


# ---------------------------------------------------------------------------
# Pallas kernels
# ---------------------------------------------------------------------------
def _dilated_causal_conv(h_f32, w_ref, b_ref, K, dilation):
    """Causal dilated conv as one MXU matmul.

    h_f32: (C_in, T) f32 activation (VMEM value).
    w_ref: (C_out, K*C_in) packed weights, column index = k*C_in + c_in.
    b_ref: (C_out, 1) f32 bias.
    Returns (C_out, T) f32.
    """
    C_in, T = h_f32.shape
    pad = (K - 1) * dilation
    if pad > 0:
        hp = jnp.concatenate(
            [jnp.zeros((C_in, pad), jnp.float32), h_f32], axis=-1)
    else:
        hp = h_f32
    # K dilated slices stacked on the sublane axis -> single matmul RHS.
    rhs = jnp.concatenate(
        [hp[:, k * dilation:k * dilation + T] for k in range(K)], axis=0)
    return jnp.dot(w_ref[...], rhs.astype(w_ref.dtype),
                   preferred_element_type=jnp.float32) + b_ref[...]


def _encoder_blocks_kernel(x_ref, *refs, block_meta):
    """Whole CausalCNN stack + AdaptiveMaxPool1d(1) for one batch element.

    x_ref : (1, C_in0, T)     storage dtype (f32 or bf16)
    refs  : per block: w1 (C_out, K*C_in), b1 (C_out, 1),
                       w2 (C_out, K*C_out), b2 (C_out, 1),
                       [wd (C_out, C_in), bd (C_out, 1)]   (only if has_down)
            then out_ref: (1, R, 1) f32 pooled features.
    block_meta: tuple of (K, dilation, has_down) per block (static).
    """
    out_ref = refs[-1]
    h = x_ref[0].astype(jnp.float32)                      # (C_in0, T)
    idx = 0
    for (K, dilation, has_down) in block_meta:
        w1, b1, w2, b2 = refs[idx:idx + 4]
        idx += 4
        h1 = _lrelu_f32(_dilated_causal_conv(h, w1, b1, K, dilation))
        h2 = _lrelu_f32(_dilated_causal_conv(h1, w2, b2, K, dilation))
        if has_down:
            wd, bd = refs[idx:idx + 2]
            idx += 2
            res = jnp.dot(wd[...], h.astype(wd.dtype),
                          preferred_element_type=jnp.float32) + bd[...]
        else:
            res = h
        h = h2 + res            # residual added AFTER the second LeakyReLU
    # Fused AdaptiveMaxPool1d(1): the final (R, T) activation never hits HBM.
    out_ref[0] = jnp.max(h, axis=-1, keepdims=True)       # (R, 1) f32


def _pool_linear_kernel(m_ref, wt_ref, b_ref, o_ref):
    # m_ref: (B, R) f32   wt_ref: (R, C_out)   b_ref: (1, C_out) f32
    y = jnp.dot(m_ref[...].astype(wt_ref.dtype), wt_ref[...],
                preferred_element_type=jnp.float32) + b_ref[...]
    o_ref[...] = y.astype(o_ref.dtype)


# ---------------------------------------------------------------------------
# Wrappers
# ---------------------------------------------------------------------------
def encoder_blocks(x, blocks):
    """Fused CausalCNN stack + max-pool.  x: (B, C_in0, T) -> (B, R, 1) f32."""
    B, C_in0, T = x.shape
    R = blocks[-1]["w1"].shape[0]

    args = [x]
    in_specs = [pl.BlockSpec((1, C_in0, T), lambda i: (i, 0, 0))]
    block_meta = []
    for p in blocks:
        has_down = p["wd"] is not None
        block_meta.append((p["K"], p["dilation"], has_down))
        args += [p["w1"], p["b1"], p["w2"], p["b2"]]
        in_specs += [
            pl.BlockSpec(p["w1"].shape, lambda i: (0, 0)),
            pl.BlockSpec(p["b1"].shape, lambda i: (0, 0)),
            pl.BlockSpec(p["w2"].shape, lambda i: (0, 0)),
            pl.BlockSpec(p["b2"].shape, lambda i: (0, 0)),
        ]
        if has_down:
            args += [p["wd"], p["bd"]]
            in_specs += [
                pl.BlockSpec(p["wd"].shape, lambda i: (0, 0)),
                pl.BlockSpec(p["bd"].shape, lambda i: (0, 0)),
            ]

    kernel = functools.partial(_encoder_blocks_kernel,
                               block_meta=tuple(block_meta))
    return pl.pallas_call(
        kernel,
        out_shape=jax.ShapeDtypeStruct((B, R, 1), jnp.float32),
        grid=(B,),
        in_specs=in_specs,
        out_specs=pl.BlockSpec((1, R, 1), lambda i: (i, 0, 0)),
        compiler_params=pltpu.CompilerParams(dimension_semantics=("parallel",)),
    )(*args)


def pooled_linear(m, wt, b):
    """Final Linear over the pooled features.  m: (B, R) -> (B, C_out) f32."""
    B, R = m.shape
    C_out = wt.shape[1]
    return pl.pallas_call(
        _pool_linear_kernel,
        out_shape=jax.ShapeDtypeStruct((B, C_out), jnp.float32),
        grid=(1,),
        in_specs=[
            pl.BlockSpec((B, R), lambda i: (0, 0)),
            pl.BlockSpec((R, C_out), lambda i: (0, 0)),
            pl.BlockSpec((1, C_out), lambda i: (0, 0)),
        ],
        out_specs=pl.BlockSpec((B, C_out), lambda i: (0, 0)),
    )(m, wt, b)


def encoder_forward(packed, x, compute_dtype=jnp.bfloat16):
    """Full CausalCNNEncoder forward.  x: (B, C_in, T) -> (B, out_channels) f32."""
    h = x.astype(compute_dtype)
    pooled = encoder_blocks(h, packed["blocks"])           # (B, R, 1) f32
    m = pooled.reshape(pooled.shape[0], pooled.shape[1])   # (B, R)
    return pooled_linear(m, packed["w_lin_t"], packed["b_lin"])


# ---------------------------------------------------------------------------
# Parameters: torch-layout init + one-time packing into kernel layout
# ---------------------------------------------------------------------------
def init_params(key, in_channels, channels, depth, reduced_size, out_channels,
                kernel_size):
    params = {"blocks": []}
    dilation = 1
    block_io = [(in_channels if i == 0 else channels, channels)
                for i in range(depth)]
    block_io.append((channels, reduced_size))
    for (ci, co) in block_io:
        key, kw1, kb1, kw2, kb2, kwd, kbd = jax.random.split(key, 7)
        p = {
            "w1": 0.2 * jax.random.normal(kw1, (co, ci, kernel_size), jnp.float32),
            "b1": 0.1 * jax.random.normal(kb1, (co,), jnp.float32),
            "w2": 0.2 * jax.random.normal(kw2, (co, co, kernel_size), jnp.float32),
            "b2": 0.1 * jax.random.normal(kb2, (co,), jnp.float32),
            "dilation": dilation,
        }
        if ci != co:
            p["wd"] = 0.2 * jax.random.normal(kwd, (co, ci, 1), jnp.float32)
            p["bd"] = 0.1 * jax.random.normal(kbd, (co,), jnp.float32)
        else:
            p["wd"] = None
            p["bd"] = None
        params["blocks"].append(p)
        dilation *= 2
    key, kwl, kbl = jax.random.split(key, 3)
    params["w_lin"] = 0.2 * jax.random.normal(kwl, (out_channels, reduced_size),
                                              jnp.float32)
    params["b_lin"] = 0.1 * jax.random.normal(kbl, (out_channels,), jnp.float32)
    return params


def pack_params(params, compute_dtype):
    """Hoist weight transposes/reshapes out of the forward pass (done once)."""
    packed = {"blocks": []}
    for p in params["blocks"]:
        co, ci, K = p["w1"].shape
        q = {
            # (C_out, C_in, K) -> (C_out, K*C_in) with column index k*C_in + c_in
            "w1": jnp.transpose(p["w1"], (0, 2, 1)).reshape(co, K * ci)
                     .astype(compute_dtype),
            "b1": p["b1"].reshape(co, 1).astype(jnp.float32),
            "w2": jnp.transpose(p["w2"], (0, 2, 1)).reshape(co, K * co)
                     .astype(compute_dtype),
            "b2": p["b2"].reshape(co, 1).astype(jnp.float32),
            "dilation": p["dilation"],
            "K": K,
        }
        if p["wd"] is not None:
            q["wd"] = p["wd"][:, :, 0].astype(compute_dtype)    # (C_out, C_in)
            q["bd"] = p["bd"].reshape(co, 1).astype(jnp.float32)
        else:
            q["wd"] = None
            q["bd"] = None
        packed["blocks"].append(q)
    packed["w_lin_t"] = jnp.transpose(params["w_lin"]).astype(compute_dtype)
    packed["b_lin"] = params["b_lin"].reshape(1, -1).astype(jnp.float32)
    return packed


# ---------------------------------------------------------------------------
# Pure-JAX reference (correctness check)
# ---------------------------------------------------------------------------
def _conv_ref(x, w, b, dilation):
    pad = (w.shape[-1] - 1) * dilation
    y = lax.conv_general_dilated(x, w, (1,), [(pad, 0)], rhs_dilation=(dilation,),
                                 dimension_numbers=("NCH", "OIH", "NCH"))
    return y + b[None, :, None]


def encoder_ref(params, x):
    h = x
    for p in params["blocks"]:
        d = p["dilation"]
        out_causal = _lrelu_f32(_conv_ref(_lrelu_f32(_conv_ref(h, p["w1"], p["b1"], d)),
                                          p["w2"], p["b2"], d))
        res = h if p["wd"] is None else _conv_ref(h, p["wd"], p["bd"], 1)
        h = out_causal + res
    m = jnp.max(h, axis=-1)                                    # (B, R)
    return m @ params["w_lin"].T + params["b_lin"][None, :]


# ---------------------------------------------------------------------------
if __name__ == "__main__":
    # Small but lane-dense shapes (T multiple of 128 keeps vector stores unmasked).
    B, in_channels, T = 2, 4, 256
    channels, depth, reduced_size, out_channels, kernel_size = 8, 2, 16, 32, 3

    key = jax.random.PRNGKey(0)
    key, kx = jax.random.split(key)
    x = jax.random.normal(kx, (B, in_channels, T), jnp.float32)   # (B, C, T)

    params = init_params(key, in_channels, channels, depth, reduced_size,
                         out_channels, kernel_size)
    ref = encoder_ref(params, x)

    # f32 path: strict check of the fused-kernel semantics.
    packed_f32 = pack_params(params, jnp.float32)
    out_f32 = jax.block_until_ready(encoder_forward(packed_f32, x, jnp.float32))
    assert out_f32.shape == (B, out_channels), out_f32.shape
    assert jnp.allclose(out_f32, ref, atol=1e-3, rtol=1e-3), (
        float(jnp.max(jnp.abs(out_f32 - ref))))

    # bf16 path (recommended on v6e/v7x: MXU-native, halves HBM/VMEM weight
    # traffic); the running activation, bias add, LeakyReLU and residual stay
    # f32 inside the fused kernel.
    packed_bf16 = pack_params(params, jnp.bfloat16)
    out_bf16 = jax.block_until_ready(encoder_forward(packed_bf16, x, jnp.bfloat16))
    assert out_bf16.shape == (B, out_channels), out_bf16.shape
    assert jnp.allclose(out_bf16, ref, atol=2e-1, rtol=1e-1), (
        float(jnp.max(jnp.abs(out_bf16 - ref))))

    print("KERNEL_OK")
</pallas_src>

<mosaic_0001>
module attributes {stable_mosaic.version = 11 : i64} {
  func.func @_encoder_blocks_kernel(%arg0: i32, %arg1: memref<1x4x256xf32, #tpu.memory_space<vmem>>, %arg2: memref<8x12xf32, #tpu.memory_space<vmem>>, %arg3: memref<8x1xf32, #tpu.memory_space<vmem>>, %arg4: memref<8x24xf32, #tpu.memory_space<vmem>>, %arg5: memref<8x1xf32, #tpu.memory_space<vmem>>, %arg6: memref<8x4xf32, #tpu.memory_space<vmem>>, %arg7: memref<8x1xf32, #tpu.memory_space<vmem>>, %arg8: memref<8x24xf32, #tpu.memory_space<vmem>>, %arg9: memref<8x1xf32, #tpu.memory_space<vmem>>, %arg10: memref<8x24xf32, #tpu.memory_space<vmem>>, %arg11: memref<8x1xf32, #tpu.memory_space<vmem>>, %arg12: memref<16x24xf32, #tpu.memory_space<vmem>>, %arg13: memref<16x1xf32, #tpu.memory_space<vmem>>, %arg14: memref<16x48xf32, #tpu.memory_space<vmem>>, %arg15: memref<16x1xf32, #tpu.memory_space<vmem>>, %arg16: memref<16x8xf32, #tpu.memory_space<vmem>>, %arg17: memref<16x1xf32, #tpu.memory_space<vmem>>, %arg18: memref<1x16x1xf32, #tpu.memory_space<vmem>>) attributes {dimension_semantics = [#tpu.dimension_semantics<parallel>], iteration_bounds = array<i64: 2>, scalar_prefetch = 0 : i64, scratch_operands = 0 : i64, tpu.core_type = #tpu.core_type<tc>, window_params = [{transform_indices = @transform_0, window_bounds = array<i64: 1, 4, 256>}, {pipeline_mode = #tpu.pipeline_mode<synchronous>, transform_indices = @transform_1, window_bounds = array<i64: 8, 12>}, {pipeline_mode = #tpu.pipeline_mode<synchronous>, transform_indices = @transform_2, window_bounds = array<i64: 8, 1>}, {pipeline_mode = #tpu.pipeline_mode<synchronous>, transform_indices = @transform_3, window_bounds = array<i64: 8, 24>}, {pipeline_mode = #tpu.pipeline_mode<synchronous>, transform_indices = @transform_4, window_bounds = array<i64: 8, 1>}, {pipeline_mode = #tpu.pipeline_mode<synchronous>, transform_indices = @transform_5, window_bounds = array<i64: 8, 4>}, {pipeline_mode = #tpu.pipeline_mode<synchronous>, transform_indices = @transform_6, window_bounds = array<i64: 8, 1>}, {pipeline_mode = #tpu.pipeline_mode<synchronous>, transform_indices = @transform_7, window_bounds = array<i64: 8, 24>}, {pipeline_mode = #tpu.pipeline_mode<synchronous>, transform_indices = @transform_8, window_bounds = array<i64: 8, 1>}, {pipeline_mode = #tpu.pipeline_mode<synchronous>, transform_indices = @transform_9, window_bounds = array<i64: 8, 24>}, {pipeline_mode = #tpu.pipeline_mode<synchronous>, transform_indices = @transform_10, window_bounds = array<i64: 8, 1>}, {pipeline_mode = #tpu.pipeline_mode<synchronous>, transform_indices = @transform_11, window_bounds = array<i64: 16, 24>}, {pipeline_mode = #tpu.pipeline_mode<synchronous>, transform_indices = @transform_12, window_bounds = array<i64: 16, 1>}, {pipeline_mode = #tpu.pipeline_mode<synchronous>, transform_indices = @transform_13, window_bounds = array<i64: 16, 48>}, {pipeline_mode = #tpu.pipeline_mode<synchronous>, transform_indices = @transform_14, window_bounds = array<i64: 16, 1>}, {pipeline_mode = #tpu.pipeline_mode<synchronous>, transform_indices = @transform_15, window_bounds = array<i64: 16, 8>}, {pipeline_mode = #tpu.pipeline_mode<synchronous>, transform_indices = @transform_16, window_bounds = array<i64: 16, 1>}, {transform_indices = @transform_17, window_bounds = array<i64: 1, 16, 1>}]} {
    %c0 = arith.constant 0 : index
    %c0_0 = arith.constant 0 : index
    %c0_1 = arith.constant 0 : index
    %0 = vector.load %arg1[%c0, %c0_0, %c0_1] : memref<1x4x256xf32, #tpu.memory_space<vmem>>, vector<1x4x256xf32>
    %1 = vector.shape_cast %0 : vector<1x4x256xf32> to vector<4x256xf32>
    %cst = arith.constant 0.000000e+00 : f32
    %2 = vector.broadcast %cst : f32 to vector<4x2xf32>
    %3 = tpu.concatenate %2, %1 in 1 : vector<4x2xf32>, vector<4x256xf32> -> vector<4x258xf32>
    %4 = vector.extract_strided_slice %3 {offsets = [0, 0], sizes = [4, 256], strides = [1, 1]} : vector<4x258xf32> to vector<4x256xf32>
    %5 = vector.extract_strided_slice %3 {offsets = [0, 1], sizes = [4, 256], strides = [1, 1]} : vector<4x258xf32> to vector<4x256xf32>
    %6 = vector.extract_strided_slice %3 {offsets = [0, 2], sizes = [4, 256], strides = [1, 1]} : vector<4x258xf32> to vector<4x256xf32>
    %7 = tpu.concatenate %4, %5, %6 in 0 : vector<4x256xf32>, vector<4x256xf32>, vector<4x256xf32> -> vector<12x256xf32>
    %c0_2 = arith.constant 0 : index
    %c0_3 = arith.constant 0 : index
    %8 = vector.load %arg2[%c0_2, %c0_3] : memref<8x12xf32, #tpu.memory_space<vmem>>, vector<8x12xf32>
    %cst_4 = arith.constant dense<0.000000e+00> : vector<8x256xf32>
    %9 = tpu.matmul %8, %7, %cst_4 {dimension_numbers = #tpu.dot_dimension_numbers<[1], [0], [0], [1], [0, 0, 1, 1], [], []>} : vector<8x12xf32>, vector<12x256xf32>, vector<8x256xf32> -> vector<8x256xf32>
    %c0_5 = arith.constant 0 : index
    %c0_6 = arith.constant 0 : index
    %10 = vector.load %arg3[%c0_5, %c0_6] : memref<8x1xf32, #tpu.memory_space<vmem>>, vector<8x1xf32>
    %11 = vector.broadcast %10 : vector<8x1xf32> to vector<8x256xf32>
    %12 = arith.addf %9, %11 : vector<8x256xf32>
    %cst_7 = arith.constant 0.000000e+00 : f32
    %13 = vector.broadcast %cst_7 : f32 to vector<8x256xf32>
    %14 = arith.cmpf ogt, %12, %13 : vector<8x256xf32>
    %cst_8 = arith.constant 0.00999999977 : f32
    %15 = vector.broadcast %cst_8 : f32 to vector<8x256xf32>
    %16 = arith.mulf %15, %12 : vector<8x256xf32>
    %17 = arith.select %14, %12, %16 : vector<8x256xi1>, vector<8x256xf32>
    %cst_9 = arith.constant 0.000000e+00 : f32
    %18 = vector.broadcast %cst_9 : f32 to vector<8x2xf32>
    %19 = tpu.concatenate %18, %17 in 1 : vector<8x2xf32>, vector<8x256xf32> -> vector<8x258xf32>
    %20 = vector.extract_strided_slice %19 {offsets = [0, 0], sizes = [8, 256], strides = [1, 1]} : vector<8x258xf32> to vector<8x256xf32>
    %21 = vector.extract_strided_slice %19 {offsets = [0, 1], sizes = [8, 256], strides = [1, 1]} : vector<8x258xf32> to vector<8x256xf32>
    %22 = vector.extract_strided_slice %19 {offsets = [0, 2], sizes = [8, 256], strides = [1, 1]} : vector<8x258xf32> to vector<8x256xf32>
    %23 = tpu.concatenate %20, %21, %22 in 0 : vector<8x256xf32>, vector<8x256xf32>, vector<8x256xf32> -> vector<24x256xf32>
    %c0_10 = arith.constant 0 : index
    %c0_11 = arith.constant 0 : index
    %24 = vector.load %arg4[%c0_10, %c0_11] : memref<8x24xf32, #tpu.memory_space<vmem>>, vector<8x24xf32>
    %cst_12 = arith.constant dense<0.000000e+00> : vector<8x256xf32>
    %25 = tpu.matmul %24, %23, %cst_12 {dimension_numbers = #tpu.dot_dimension_numbers<[1], [0], [0], [1], [0, 0, 1, 1], [], []>} : vector<8x24xf32>, vector<24x256xf32>, vector<8x256xf32> -> vector<8x256xf32>
    %c0_13 = arith.constant 0 : index
    %c0_14 = arith.constant 0 : index
    %26 = vector.load %arg5[%c0_13, %c0_14] : memref<8x1xf32, #tpu.memory_space<vmem>>, vector<8x1xf32>
    %27 = vector.broadcast %26 : vector<8x1xf32> to vector<8x256xf32>
    %28 = arith.addf %25, %27 : vector<8x256xf32>
    %cst_15 = arith.constant 0.000000e+00 : f32
    %29 = vector.broadcast %cst_15 : f32 to vector<8x256xf32>
    %30 = arith.cmpf ogt, %28, %29 : vector<8x256xf32>
    %cst_16 = arith.constant 0.00999999977 : f32
    %31 = vector.broadcast %cst_16 : f32 to vector<8x256xf32>
    %32 = arith.mulf %31, %28 : vector<8x256xf32>
    %33 = arith.select %30, %28, %32 : vector<8x256xi1>, vector<8x256xf32>
    %c0_17 = arith.constant 0 : index
    %c0_18 = arith.constant 0 : index
    %34 = vector.load %arg6[%c0_17, %c0_18] : memref<8x4xf32, #tpu.memory_space<vmem>>, vector<8x4xf32>
    %cst_19 = arith.constant dense<0.000000e+00> : vector<8x256xf32>
    %35 = tpu.matmul %34, %1, %cst_19 {dimension_numbers = #tpu.dot_dimension_numbers<[1], [0], [0], [1], [0, 0, 1, 1], [], []>} : vector<8x4xf32>, vector<4x256xf32>, vector<8x256xf32> -> vector<8x256xf32>
    %c0_20 = arith.constant 0 : index
    %c0_21 = arith.constant 0 : index
    %36 = vector.load %arg7[%c0_20, %c0_21] : memref<8x1xf32, #tpu.memory_space<vmem>>, vector<8x1xf32>
    %37 = vector.broadcast %36 : vector<8x1xf32> to vector<8x256xf32>
    %38 = arith.addf %35, %37 : vector<8x256xf32>
    %39 = arith.addf %33, %38 : vector<8x256xf32>
    %cst_22 = arith.constant 0.000000e+00 : f32
    %40 = vector.broadcast %cst_22 : f32 to vector<8x4xf32>
    %41 = tpu.concatenate %40, %39 in 1 : vector<8x4xf32>, vector<8x256xf32> -> vector<8x260xf32>
    %42 = vector.extract_strided_slice %41 {offsets = [0, 0], sizes = [8, 256], strides = [1, 1]} : vector<8x260xf32> to vector<8x256xf32>
    %43 = vector.extract_strided_slice %41 {offsets = [0, 2], sizes = [8, 256], strides = [1, 1]} : vector<8x260xf32> to vector<8x256xf32>
    %44 = vector.extract_strided_slice %41 {offsets = [0, 4], sizes = [8, 256], strides = [1, 1]} : vector<8x260xf32> to vector<8x256xf32>
    %45 = tpu.concatenate %42, %43, %44 in 0 : vector<8x256xf32>, vector<8x256xf32>, vector<8x256xf32> -> vector<24x256xf32>
    %c0_23 = arith.constant 0 : index
    %c0_24 = arith.constant 0 : index
    %46 = vector.load %arg8[%c0_23, %c0_24] : memref<8x24xf32, #tpu.memory_space<vmem>>, vector<8x24xf32>
    %cst_25 = arith.constant dense<0.000000e+00> : vector<8x256xf32>
    %47 = tpu.matmul %46, %45, %cst_25 {dimension_numbers = #tpu.dot_dimension_numbers<[1], [0], [0], [1], [0, 0, 1, 1], [], []>} : vector<8x24xf32>, vector<24x256xf32>, vector<8x256xf32> -> vector<8x256xf32>
    %c0_26 = arith.constant 0 : index
    %c0_27 = arith.constant 0 : index
    %48 = vector.load %arg9[%c0_26, %c0_27] : memref<8x1xf32, #tpu.memory_space<vmem>>, vector<8x1xf32>
    %49 = vector.broadcast %48 : vector<8x1xf32> to vector<8x256xf32>
    %50 = arith.addf %47, %49 : vector<8x256xf32>
    %cst_28 = arith.constant 0.000000e+00 : f32
    %51 = vector.broadcast %cst_28 : f32 to vector<8x256xf32>
    %52 = arith.cmpf ogt, %50, %51 : vector<8x256xf32>
    %cst_29 = arith.constant 0.00999999977 : f32
    %53 = vector.broadcast %cst_29 : f32 to vector<8x256xf32>
    %54 = arith.mulf %53, %50 : vector<8x256xf32>
    %55 = arith.select %52, %50, %54 : vector<8x256xi1>, vector<8x256xf32>
    %cst_30 = arith.constant 0.000000e+00 : f32
    %56 = vector.broadcast %cst_30 : f32 to vector<8x4xf32>
    %57 = tpu.concatenate %56, %55 in 1 : vector<8x4xf32>, vector<8x256xf32> -> vector<8x260xf32>
    %58 = vector.extract_strided_slice %57 {offsets = [0, 0], sizes = [8, 256], strides = [1, 1]} : vector<8x260xf32> to vector<8x256xf32>
    %59 = vector.extract_strided_slice %57 {offsets = [0, 2], sizes = [8, 256], strides = [1, 1]} : vector<8x260xf32> to vector<8x256xf32>
    %60 = vector.extract_strided_slice %57 {offsets = [0, 4], sizes = [8, 256], strides = [1, 1]} : vector<8x260xf32> to vector<8x256xf32>
    %61 = tpu.concatenate %58, %59, %60 in 0 : vector<8x256xf32>, vector<8x256xf32>, vector<8x256xf32> -> vector<24x256xf32>
    %c0_31 = arith.constant 0 : index
    %c0_32 = arith.constant 0 : index
    %62 = vector.load %arg10[%c0_31, %c0_32] : memref<8x24xf32, #tpu.memory_space<vmem>>, vector<8x24xf32>
    %cst_33 = arith.constant dense<0.000000e+00> : vector<8x256xf32>
    %63 = tpu.matmul %62, %61, %cst_33 {dimension_numbers = #tpu.dot_dimension_numbers<[1], [0], [0], [1], [0, 0, 1, 1], [], []>} : vector<8x24xf32>, vector<24x256xf32>, vector<8x256xf32> -> vector<8x256xf32>
    %c0_34 = arith.constant 0 : index
    %c0_35 = arith.constant 0 : index
    %64 = vector.load %arg11[%c0_34, %c0_35] : memref<8x1xf32, #tpu.memory_space<vmem>>, vector<8x1xf32>
    %65 = vector.broadcast %64 : vector<8x1xf32> to vector<8x256xf32>
    %66 = arith.addf %63, %65 : vector<8x256xf32>
    %cst_36 = arith.constant 0.000000e+00 : f32
    %67 = vector.broadcast %cst_36 : f32 to vector<8x256xf32>
    %68 = arith.cmpf ogt, %66, %67 : vector<8x256xf32>
    %cst_37 = arith.constant 0.00999999977 : f32
    %69 = vector.broadcast %cst_37 : f32 to vector<8x256xf32>
    %70 = arith.mulf %69, %66 : vector<8x256xf32>
    %71 = arith.select %68, %66, %70 : vector<8x256xi1>, vector<8x256xf32>
    %72 = arith.addf %71, %39 : vector<8x256xf32>
    %cst_38 = arith.constant 0.000000e+00 : f32
    %73 = vector.broadcast %cst_38 : f32 to vector<8x8xf32>
    %74 = tpu.concatenate %73, %72 in 1 : vector<8x8xf32>, vector<8x256xf32> -> vector<8x264xf32>
    %75 = vector.extract_strided_slice %74 {offsets = [0, 0], sizes = [8, 256], strides = [1, 1]} : vector<8x264xf32> to vector<8x256xf32>
    %76 = vector.extract_strided_slice %74 {offsets = [0, 4], sizes = [8, 256], strides = [1, 1]} : vector<8x264xf32> to vector<8x256xf32>
    %77 = vector.extract_strided_slice %74 {offsets = [0, 8], sizes = [8, 256], strides = [1, 1]} : vector<8x264xf32> to vector<8x256xf32>
    %78 = tpu.concatenate %75, %76, %77 in 0 : vector<8x256xf32>, vector<8x256xf32>, vector<8x256xf32> -> vector<24x256xf32>
    %c0_39 = arith.constant 0 : index
    %c0_40 = arith.constant 0 : index
    %79 = vector.load %arg12[%c0_39, %c0_40] : memref<16x24xf32, #tpu.memory_space<vmem>>, vector<16x24xf32>
    %cst_41 = arith.constant dense<0.000000e+00> : vector<16x256xf32>
    %80 = tpu.matmul %79, %78, %cst_41 {dimension_numbers = #tpu.dot_dimension_numbers<[1], [0], [0], [1], [0, 0, 1, 1], [], []>} : vector<16x24xf32>, vector<24x256xf32>, vector<16x256xf32> -> vector<16x256xf32>
    %c0_42 = arith.constant 0 : index
    %c0_43 = arith.constant 0 : index
    %81 = vector.load %arg13[%c0_42, %c0_43] : memref<16x1xf32, #tpu.memory_space<vmem>>, vector<16x1xf32>
    %82 = vector.broadcast %81 : vector<16x1xf32> to vector<16x256xf32>
    %83 = arith.addf %80, %82 : vector<16x256xf32>
    %cst_44 = arith.constant 0.000000e+00 : f32
    %84 = vector.broadcast %cst_44 : f32 to vector<16x256xf32>
    %85 = arith.cmpf ogt, %83, %84 : vector<16x256xf32>
    %cst_45 = arith.constant 0.00999999977 : f32
    %86 = vector.broadcast %cst_45 : f32 to vector<16x256xf32>
    %87 = arith.mulf %86, %83 : vector<16x256xf32>
    %88 = arith.select %85, %83, %87 : vector<16x256xi1>, vector<16x256xf32>
    %cst_46 = arith.constant 0.000000e+00 : f32
    %89 = vector.broadcast %cst_46 : f32 to vector<16x8xf32>
    %90 = tpu.concatenate %89, %88 in 1 : vector<16x8xf32>, vector<16x256xf32> -> vector<16x264xf32>
    %91 = vector.extract_strided_slice %90 {offsets = [0, 0], sizes = [16, 256], strides = [1, 1]} : vector<16x264xf32> to vector<16x256xf32>
    %92 = vector.extract_strided_slice %90 {offsets = [0, 4], sizes = [16, 256], strides = [1, 1]} : vector<16x264xf32> to vector<16x256xf32>
    %93 = vector.extract_strided_slice %90 {offsets = [0, 8], sizes = [16, 256], strides = [1, 1]} : vector<16x264xf32> to vector<16x256xf32>
    %94 = tpu.concatenate %91, %92, %93 in 0 : vector<16x256xf32>, vector<16x256xf32>, vector<16x256xf32> -> vector<48x256xf32>
    %c0_47 = arith.constant 0 : index
    %c0_48 = arith.constant 0 : index
    %95 = vector.load %arg14[%c0_47, %c0_48] : memref<16x48xf32, #tpu.memory_space<vmem>>, vector<16x48xf32>
    %cst_49 = arith.constant dense<0.000000e+00> : vector<16x256xf32>
    %96 = tpu.matmul %95, %94, %cst_49 {dimension_numbers = #tpu.dot_dimension_numbers<[1], [0], [0], [1], [0, 0, 1, 1], [], []>} : vector<16x48xf32>, vector<48x256xf32>, vector<16x256xf32> -> vector<16x256xf32>
    %c0_50 = arith.constant 0 : index
    %c0_51 = arith.constant 0 : index
    %97 = vector.load %arg15[%c0_50, %c0_51] : memref<16x1xf32, #tpu.memory_space<vmem>>, vector<16x1xf32>
    %98 = vector.broadcast %97 : vector<16x1xf32> to vector<16x256xf32>
    %99 = arith.addf %96, %98 : vector<16x256xf32>
    %cst_52 = arith.constant 0.000000e+00 : f32
    %100 = vector.broadcast %cst_52 : f32 to vector<16x256xf32>
    %101 = arith.cmpf ogt, %99, %100 : vector<16x256xf32>
    %cst_53 = arith.constant 0.00999999977 : f32
    %102 = vector.broadcast %cst_53 : f32 to vector<16x256xf32>
    %103 = arith.mulf %102, %99 : vector<16x256xf32>
    %104 = arith.select %101, %99, %103 : vector<16x256xi1>, vector<16x256xf32>
    %c0_54 = arith.constant 0 : index
    %c0_55 = arith.constant 0 : index
    %105 = vector.load %arg16[%c0_54, %c0_55] : memref<16x8xf32, #tpu.memory_space<vmem>>, vector<16x8xf32>
    %cst_56 = arith.constant dense<0.000000e+00> : vector<16x256xf32>
    %106 = tpu.matmul %105, %72, %cst_56 {dimension_numbers = #tpu.dot_dimension_numbers<[1], [0], [0], [1], [0, 0, 1, 1], [], []>} : vector<16x8xf32>, vector<8x256xf32>, vector<16x256xf32> -> vector<16x256xf32>
    %c0_57 = arith.constant 0 : index
    %c0_58 = arith.constant 0 : index
    %107 = vector.load %arg17[%c0_57, %c0_58] : memref<16x1xf32, #tpu.memory_space<vmem>>, vector<16x1xf32>
    %108 = vector.broadcast %107 : vector<16x1xf32> to vector<16x256xf32>
    %109 = arith.addf %106, %108 : vector<16x256xf32>
    %110 = arith.addf %104, %109 : vector<16x256xf32>
    %cst_59 = arith.constant dense<0xFF800000> : vector<16xf32>
    %111 = vector.multi_reduction <maximumf>, %110, %cst_59 [1] : vector<16x256xf32> to vector<16xf32>
    %112 = vector.shape_cast %111 : vector<16xf32> to vector<16x1xf32>
    %c0_60 = arith.constant 0 : index
    %c0_61 = arith.constant 0 : index
    %c0_62 = arith.constant 0 : index
    %113 = vector.load %arg18[%c0_60, %c0_61, %c0_62] : memref<1x16x1xf32, #tpu.memory_space<vmem>>, vector<1x16x1xf32>
    %114 = vector.shape_cast %113 : vector<1x16x1xf32> to vector<16x1xf32>
    %115 = vector.shape_cast %112 : vector<16x1xf32> to vector<1x16x1xf32>
    tpu.vector_store %arg18[%c0_60, %c0_61, %c0_62], %115 {strides = array<i32>} : memref<1x16x1xf32, #tpu.memory_space<vmem>>, vector<1x16x1xf32>,
    return
  }
  func.func @transform_0(%arg0: i32) -> (i32, i32, i32) {
    %c0_i32 = arith.constant 0 : i32
    %c0_i32_0 = arith.constant 0 : i32
    %c0_i32_1 = arith.constant 0 : i32
    return %arg0, %c0_i32, %c0_i32_0 : i32, i32, i32
  }
  func.func @transform_1(%arg0: i32) -> (i32, i32) {
    %c0_i32 = arith.constant 0 : i32
    %c0_i32_0 = arith.constant 0 : i32
    %c0_i32_1 = arith.constant 0 : i32
    return %c0_i32, %c0_i32_0 : i32, i32
  }
  func.func @transform_2(%arg0: i32) -> (i32, i32) {
    %c0_i32 = arith.constant 0 : i32
    %c0_i32_0 = arith.constant 0 : i32
    %c0_i32_1 = arith.constant 0 : i32
    return %c0_i32, %c0_i32_0 : i32, i32
  }
  func.func @transform_3(%arg0: i32) -> (i32, i32) {
    %c0_i32 = arith.constant 0 : i32
    %c0_i32_0 = arith.constant 0 : i32
    %c0_i32_1 = arith.constant 0 : i32
    return %c0_i32, %c0_i32_0 : i32, i32
  }
  func.func @transform_4(%arg0: i32) -> (i32, i32) {
    %c0_i32 = arith.constant 0 : i32
    %c0_i32_0 = arith.constant 0 : i32
    %c0_i32_1 = arith.constant 0 : i32
    return %c0_i32, %c0_i32_0 : i32, i32
  }
  func.func @transform_5(%arg0: i32) -> (i32, i32) {
    %c0_i32 = arith.constant 0 : i32
    %c0_i32_0 = arith.constant 0 : i32
    %c0_i32_1 = arith.constant 0 : i32
    return %c0_i32, %c0_i32_0 : i32, i32
  }
  func.func @transform_6(%arg0: i32) -> (i32, i32) {
    %c0_i32 = arith.constant 0 : i32
    %c0_i32_0 = arith.constant 0 : i32
    %c0_i32_1 = arith.constant 0 : i32
    return %c0_i32, %c0_i32_0 : i32, i32
  }
  func.func @transform_7(%arg0: i32) -> (i32, i32) {
    %c0_i32 = arith.constant 0 : i32
    %c0_i32_0 = arith.constant 0 : i32
    %c0_i32_1 = arith.constant 0 : i32
    return %c0_i32, %c0_i32_0 : i32, i32
  }
  func.func @transform_8(%arg0: i32) -> (i32, i32) {
    %c0_i32 = arith.constant 0 : i32
    %c0_i32_0 = arith.constant 0 : i32
    %c0_i32_1 = arith.constant 0 : i32
    return %c0_i32, %c0_i32_0 : i32, i32
  }
  func.func @transform_9(%arg0: i32) -> (i32, i32) {
    %c0_i32 = arith.constant 0 : i32
    %c0_i32_0 = arith.constant 0 : i32
    %c0_i32_1 = arith.constant 0 : i32
    return %c0_i32, %c0_i32_0 : i32, i32
  }
  func.func @transform_10(%arg0: i32) -> (i32, i32) {
    %c0_i32 = arith.constant 0 : i32
    %c0_i32_0 = arith.constant 0 : i32
    %c0_i32_1 = arith.constant 0 : i32
    return %c0_i32, %c0_i32_0 : i32, i32
  }
  func.func @transform_11(%arg0: i32) -> (i32, i32) {
    %c0_i32 = arith.constant 0 : i32
    %c0_i32_0 = arith.constant 0 : i32
    %c0_i32_1 = arith.constant 0 : i32
    return %c0_i32, %c0_i32_0 : i32, i32
  }
  func.func @transform_12(%arg0: i32) -> (i32, i32) {
    %c0_i32 = arith.constant 0 : i32
    %c0_i32_0 = arith.constant 0 : i32
    %c0_i32_1 = arith.constant 0 : i32
    return %c0_i32, %c0_i32_0 : i32, i32
  }
  func.func @transform_13(%arg0: i32) -> (i32, i32) {
    %c0_i32 = arith.constant 0 : i32
    %c0_i32_0 = arith.constant 0 : i32
    %c0_i32_1 = arith.constant 0 : i32
    return %c0_i32, %c0_i32_0 : i32, i32
  }
  func.func @transform_14(%arg0: i32) -> (i32, i32) {
    %c0_i32 = arith.constant 0 : i32
    %c0_i32_0 = arith.constant 0 : i32
    %c0_i32_1 = arith.constant 0 : i32
    return %c0_i32, %c0_i32_0 : i32, i32
  }
  func.func @transform_15(%arg0: i32) -> (i32, i32) {
    %c0_i32 = arith.constant 0 : i32
    %c0_i32_0 = arith.constant 0 : i32
    %c0_i32_1 = arith.constant 0 : i32
    return %c0_i32, %c0_i32_0 : i32, i32
  }
  func.func @transform_16(%arg0: i32) -> (i32, i32) {
    %c0_i32 = arith.constant 0 : i32
    %c0_i32_0 = arith.constant 0 : i32
    %c0_i32_1 = arith.constant 0 : i32
    return %c0_i32, %c0_i32_0 : i32, i32
  }
  func.func @transform_17(%arg0: i32) -> (i32, i32, i32) {
    %c0_i32 = arith.constant 0 : i32
    %c0_i32_0 = arith.constant 0 : i32
    %c0_i32_1 = arith.constant 0 : i32
    return %arg0, %c0_i32, %c0_i32_0 : i32, i32, i32
  }
}

</mosaic_0001>

<llo_original>
// kernel: tpu_custom_call.1
$region0: #{tpu_custom_call.1}
  #allocation0 [shape = 'u32[]', space=smem, size = 0x4, offset = 0x4, fixed_abs, tag = 'smem constant byte address 0x4 - core index']
  #allocation1 [shape = 'u32[144,128]{1,0:T(1,128)}', space=vmem, size = 0x12000, scoped, tag = 'internal scratch']
  %s0 = inlined_call_operand.vmem [shape: f32[2,4,256], index: 0, kind: input, shape index: {}]
  %s1 = inlined_call_operand.vmem [shape: f32[8,12], index: 1, kind: input, shape index: {}]
  %s2 = inlined_call_operand.vmem [shape: f32[8,1], index: 2, kind: input, shape index: {}]
  %s3 = inlined_call_operand.vmem [shape: f32[8,24], index: 3, kind: input, shape index: {}]
  %s4 = inlined_call_operand.vmem [shape: f32[8,1], index: 4, kind: input, shape index: {}]
  %s5 = inlined_call_operand.vmem [shape: f32[8,4], index: 5, kind: input, shape index: {}]
  %s6 = inlined_call_operand.vmem [shape: f32[8,1], index: 6, kind: input, shape index: {}]
  %s7 = inlined_call_operand.vmem [shape: f32[8,24], index: 7, kind: input, shape index: {}]
  %s8 = inlined_call_operand.vmem [shape: f32[8,1], index: 8, kind: input, shape index: {}]
  %s9 = inlined_call_operand.vmem [shape: f32[8,24], index: 9, kind: input, shape index: {}]
  %s10 = inlined_call_operand.vmem [shape: f32[8,1], index: 10, kind: input, shape index: {}]
  %s11 = inlined_call_operand.vmem [shape: f32[16,24], index: 11, kind: input, shape index: {}]
  %s12 = inlined_call_operand.vmem [shape: f32[16,1], index: 12, kind: input, shape index: {}]
  %s13 = inlined_call_operand.vmem [shape: f32[16,48], index: 13, kind: input, shape index: {}]
  %s14 = inlined_call_operand.vmem [shape: f32[16,1], index: 14, kind: input, shape index: {}]
  %s15 = inlined_call_operand.vmem [shape: f32[16,8], index: 15, kind: input, shape index: {}]
  %s16 = inlined_call_operand.vmem [shape: f32[16,1], index: 16, kind: input, shape index: {}]
  %s17 = inlined_call_operand.vmem [shape: f32[2,16,1], index: 17, kind: output, shape index: {}]
  %s18 = sld [smem:[#allocation0]]
  $region101: #{tpu_custom_call.1} parent=0
    _
  %s20 = ssub.s32 1, %s18
  %s21 = scalar_select 0, %s20, %s18
  loop: start=0, step=1, limit=4
  $region2: #{tpu_custom_call.1} parent=0 // loop_pre_header
    _
  $region3: #{tpu_custom_call.1} parent=0 // loop_header
    %s23 = sphi 0, %s27
    %p24 = scmp.ge.s32.totalorder %s23, 4
    %s33 = sphi 0, %s35
    %s36 = sphi 0, %s33
    %s37 = sphi 0, %s36
    %s53 = sphi 0, %s37
    %s57 = sphi 0, %s57
    %s59 = sphi 0, %s57
    %s60 = sphi 0, %s59
    %s74 = sphi 0, %s60
    %s78 = sphi 0, %s78
    %s80 = sphi 0, %s78
    %s81 = sphi 0, %s80
    %s95 = sphi 0, %s81
    %s99 = sphi 0, %s99
    %s101 = sphi 0, %s99
    %s102 = sphi 0, %s101
    %s116 = sphi 0, %s102
    %s120 = sphi 0, %s120
    %s122 = sphi 0, %s120
    %s123 = sphi 0, %s122
    %s137 = sphi 0, %s123
    %s141 = sphi 0, %s141
    %s143 = sphi 0, %s141
    %s144 = sphi 0, %s143
    %s158 = sphi 0, %s144
    %s162 = sphi 0, %s162
    %s164 = sphi 0, %s162
    %s165 = sphi 0, %s164
    %s179 = sphi 0, %s165
    %s183 = sphi 0, %s183
    %s185 = sphi 0, %s183
    %s186 = sphi 0, %s185
    %s200 = sphi 0, %s186
    %s204 = sphi 0, %s204
    %s206 = sphi 0, %s204
    %s207 = sphi 0, %s206
    %s221 = sphi 0, %s207
    %s225 = sphi 0, %s225
    %s227 = sphi 0, %s225
    %s228 = sphi 0, %s227
    %s242 = sphi 0, %s228
    %s246 = sphi 0, %s246
    %s248 = sphi 0, %s246
    %s249 = sphi 0, %s248
    %s263 = sphi 0, %s249
    %s267 = sphi 0, %s267
    %s269 = sphi 0, %s267
    %s270 = sphi 0, %s269
    %s284 = sphi 0, %s270
    %s288 = sphi 0, %s288
    %s290 = sphi 0, %s288
    %s291 = sphi 0, %s290
    %s305 = sphi 0, %s291
    %s309 = sphi 0, %s309
    %s311 = sphi 0, %s309
    %s312 = sphi 0, %s311
    %s326 = sphi 0, %s312
    %s330 = sphi 0, %s330
    %s332 = sphi 0, %s330
    %s333 = sphi 0, %s332
    %s347 = sphi 0, %s333
    %s351 = sphi 0, %s351
    %s353 = sphi 0, %s351
    %s354 = sphi 0, %s353
    %s368 = sphi 0, %s354
    %s372 = sphi 0, %s372
    %s374 = sphi 0, %s372
    %s375 = sphi 0, %s374
    %s389 = sphi 0, %s375
    %s395 = sphi 0, %s397
    %s398 = sphi 0, %s395
    %s399 = sphi 0, %s398
    %s415 = sphi 0, %s399
  $region4: #{tpu_custom_call.1} parent=0 // loop_header_branch
    %26 = sbr.rel (%p24) target = $region8
  $region5: #{tpu_custom_call.1} parent=0 // loop_body
    %s28 = ssub.s32 %s23, 1
    %s29 = ssub.s32 %s23, 2
    %s30 = sadd.s32 %s23, 1
    %s31 = ssub.s32 %s23, %s30
    %p32 = scmp.eq.s32.totalorder %s31, 0
    %s34 = sadd.s32 %s33, 1
    %s35 = scalar_select %p32, %s33, %s34
    %p38 = pneg %p32
    %p39 = scmp.eq.s32.totalorder %s23, 1
    %p40 = por %p38, %p39
    %p41 = scmp.ne.s32.totalorder %s33, %s36
    %p42 = scmp.eq.s32.totalorder %s23, 0
    %p43 = por %p41, %p42
    %p44 = scmp.ne.s32.totalorder %s33, %s36
    %p45 = scmp.eq.s32.totalorder %s28, 1
    %p46 = por %p44, %p45
    %p47 = scmp.ne.s32.totalorder %s36, %s37
    %p48 = scmp.eq.s32.totalorder %s28, 0
    %p49 = por %p47, %p48
    %p50 = scmp.ne.s32.totalorder %s36, %s37
    %p51 = scmp.eq.s32.totalorder %s29, 1
    %p52 = por %p50, %p51
    %p54 = scmp.ne.s32.totalorder %s37, %s53
    %p55 = scmp.eq.s32.totalorder %s29, 0
    %p56 = por %p54, %p55
    %s58 = sadd.s32 %s57, 1
    %p61 = scmp.eq.s32.totalorder %s23, 1
    %p62 = scmp.ne.s32.totalorder %s57, %s59
    %p63 = scmp.eq.s32.totalorder %s23, 0
    %p64 = por %p62, %p63
    %p65 = scmp.ne.s32.totalorder %s57, %s59
    %p66 = scmp.eq.s32.totalorder %s28, 1
    %p67 = por %p65, %p66
    %p68 = scmp.ne.s32.totalorder %s59, %s60
    %p69 = scmp.eq.s32.totalorder %s28, 0
    %p70 = por %p68, %p69
    %p71 = scmp.ne.s32.totalorder %s59, %s60
    %p72 = scmp.eq.s32.totalorder %s29, 1
    %p73 = por %p71, %p72
    %p75 = scmp.ne.s32.totalorder %s60, %s74
    %p76 = scmp.eq.s32.totalorder %s29, 0
    %p77 = por %p75, %p76
    %s79 = sadd.s32 %s78, 1
    %p82 = scmp.eq.s32.totalorder %s23, 1
    %p83 = scmp.ne.s32.totalorder %s78, %s80
    %p84 = scmp.eq.s32.totalorder %s23, 0
    %p85 = por %p83, %p84
    %p86 = scmp.ne.s32.totalorder %s78, %s80
    %p87 = scmp.eq.s32.totalorder %s28, 1
    %p88 = por %p86, %p87
    %p89 = scmp.ne.s32.totalorder %s80, %s81
    %p90 = scmp.eq.s32.totalorder %s28, 0
    %p91 = por %p89, %p90
    %p92 = scmp.ne.s32.totalorder %s80, %s81
    %p93 = scmp.eq.s32.totalorder %s29, 1
    %p94 = por %p92, %p93
    %p96 = scmp.ne.s32.totalorder %s81, %s95
    %p97 = scmp.eq.s32.totalorder %s29, 0
    %p98 = por %p96, %p97
    %s100 = sadd.s32 %s99, 1
    %p103 = scmp.eq.s32.totalorder %s23, 1
    %p104 = scmp.ne.s32.totalorder %s99, %s101
    %p105 = scmp.eq.s32.totalorder %s23, 0
    %p106 = por %p104, %p105
    %p107 = scmp.ne.s32.totalorder %s99, %s101
    %p108 = scmp.eq.s32.totalorder %s28, 1
    %p109 = por %p107, %p108
    %p110 = scmp.ne.s32.totalorder %s101, %s102
    %p111 = scmp.eq.s32.totalorder %s28, 0
    %p112 = por %p110, %p111
    %p113 = scmp.ne.s32.totalorder %s101, %s102
    %p114 = scmp.eq.s32.totalorder %s29, 1
    %p115 = por %p113, %p114
    %p117 = scmp.ne.s32.totalorder %s102, %s116
    %p118 = scmp.eq.s32.totalorder %s29, 0
    %p119 = por %p117, %p118
    %s121 = sadd.s32 %s120, 1
    %p124 = scmp.eq.s32.totalorder %s23, 1
    %p125 = scmp.ne.s32.totalorder %s120, %s122
    %p126 = scmp.eq.s32.totalorder %s23, 0
    %p127 = por %p125, %p126
    %p128 = scmp.ne.s32.totalorder %s120, %s122
    %p129 = scmp.eq.s32.totalorder %s28, 1
    %p130 = por %p128, %p129
    %p131 = scmp.ne.s32.totalorder %s122, %s123
    %p132 = scmp.eq.s32.totalorder %s28, 0
    %p133 = por %p131, %p132
    %p134 = scmp.ne.s32.totalorder %s122, %s123
    %p135 = scmp.eq.s32.totalorder %s29, 1
    %p136 = por %p134, %p135
    %p138 = scmp.ne.s32.totalorder %s123, %s137
    %p139 = scmp.eq.s32.totalorder %s29, 0
    %p140 = por %p138, %p139
    %s142 = sadd.s32 %s141, 1
    %p145 = scmp.eq.s32.totalorder %s23, 1
    %p146 = scmp.ne.s32.totalorder %s141, %s143
    %p147 = scmp.eq.s32.totalorder %s23, 0
    %p148 = por %p146, %p147
    %p149 = scmp.ne.s32.totalorder %s141, %s143
    %p150 = scmp.eq.s32.totalorder %s28, 1
    %p151 = por %p149, %p150
    %p152 = scmp.ne.s32.totalorder %s143, %s144
    %p153 = scmp.eq.s32.totalorder %s28, 0
    %p154 = por %p152, %p153
    %p155 = scmp.ne.s32.totalorder %s143, %s144
    %p156 = scmp.eq.s32.totalorder %s29, 1
    %p157 = por %p155, %p156
    %p159 = scmp.ne.s32.totalorder %s144, %s158
    %p160 = scmp.eq.s32.totalorder %s29, 0
    %p161 = por %p159, %p160
    %s163 = sadd.s32 %s162, 1
    %p166 = scmp.eq.s32.totalorder %s23, 1
    %p167 = scmp.ne.s32.totalorder %s162, %s164
    %p168 = scmp.eq.s32.totalorder %s23, 0
    %p169 = por %p167, %p168
    %p170 = scmp.ne.s32.totalorder %s162, %s164
    %p171 = scmp.eq.s32.totalorder %s28, 1
    %p172 = por %p170, %p171
    %p173 = scmp.ne.s32.totalorder %s164, %s165
    %p174 = scmp.eq.s32.totalorder %s28, 0
    %p175 = por %p173, %p174
    %p176 = scmp.ne.s32.totalorder %s164, %s165
    %p177 = scmp.eq.s32.totalorder %s29, 1
    %p178 = por %p176, %p177
    %p180 = scmp.ne.s32.totalorder %s165, %s179
    %p181 = scmp.eq.s32.totalorder %s29, 0
    %p182 = por %p180, %p181
    %s184 = sadd.s32 %s183, 1
    %p187 = scmp.eq.s32.totalorder %s23, 1
    %p188 = scmp.ne.s32.totalorder %s183, %s185
    %p189 = scmp.eq.s32.totalorder %s23, 0
    %p190 = por %p188, %p189
    %p191 = scmp.ne.s32.totalorder %s183, %s185
    %p192 = scmp.eq.s32.totalorder %s28, 1
    %p193 = por %p191, %p192
    %p194 = scmp.ne.s32.totalorder %s185, %s186
    %p195 = scmp.eq.s32.totalorder %s28, 0
    %p196 = por %p194, %p195
    %p197 = scmp.ne.s32.totalorder %s185, %s186
    %p198 = scmp.eq.s32.totalorder %s29, 1
    %p199 = por %p197, %p198
    %p201 = scmp.ne.s32.totalorder %s186, %s200
    %p202 = scmp.eq.s32.totalorder %s29, 0
    %p203 = por %p201, %p202
    %s205 = sadd.s32 %s204, 1
    %p208 = scmp.eq.s32.totalorder %s23, 1
    %p209 = scmp.ne.s32.totalorder %s204, %s206
    %p210 = scmp.eq.s32.totalorder %s23, 0
    %p211 = por %p209, %p210
    %p212 = scmp.ne.s32.totalorder %s204, %s206
    %p213 = scmp.eq.s32.totalorder %s28, 1
    %p214 = por %p212, %p213
    %p215 = scmp.ne.s32.totalorder %s206, %s207
    %p216 = scmp.eq.s32.totalorder %s28, 0
    %p217 = por %p215, %p216
    %p218 = scmp.ne.s32.totalorder %s206, %s207
    %p219 = scmp.eq.s32.totalorder %s29, 1
    %p220 = por %p218, %p219
    %p222 = scmp.ne.s32.totalorder %s207, %s221
    %p223 = scmp.eq.s32.totalorder %s29, 0
    %p224 = por %p222, %p223
    %s226 = sadd.s32 %s225, 1
    %p229 = scmp.eq.s32.totalorder %s23, 1
    %p230 = scmp.ne.s32.totalorder %s225, %s227
    %p231 = scmp.eq.s32.totalorder %s23, 0
    %p232 = por %p230, %p231
    %p233 = scmp.ne.s32.totalorder %s225, %s227
    %p234 = scmp.eq.s32.totalorder %s28, 1
    %p235 = por %p233, %p234
    %p236 = scmp.ne.s32.totalorder %s227, %s228
    %p237 = scmp.eq.s32.totalorder %s28, 0
    %p238 = por %p236, %p237
    %p239 = scmp.ne.s32.totalorder %s227, %s228
    %p240 = scmp.eq.s32.totalorder %s29, 1
    %p241 = por %p239, %p240
    %p243 = scmp.ne.s32.totalorder %s228, %s242
    %p244 = scmp.eq.s32.totalorder %s29, 0
    %p245 = por %p243, %p244
    %s247 = sadd.s32 %s246, 1
    %p250 = scmp.eq.s32.totalorder %s23, 1
    %p251 = scmp.ne.s32.totalorder %s246, %s248
    %p252 = scmp.eq.s32.totalorder %s23, 0
    %p253 = por %p251, %p252
    %p254 = scmp.ne.s32.totalorder %s246, %s248
    %p255 = scmp.eq.s32.totalorder %s28, 1
    %p256 = por %p254, %p255
    %p257 = scmp.ne.s32.totalorder %s248, %s249
    %p258 = scmp.eq.s32.totalorder %s28, 0
    %p259 = por %p257, %p258
    %p260 = scmp.ne.s32.totalorder %s248, %s249
    %p261 = scmp.eq.s32.totalorder %s29, 1
    %p262 = por %p260, %p261
    %p264 = scmp.ne.s32.totalorder %s249, %s263
    %p265 = scmp.eq.s32.totalorder %s29, 0
    %p266 = por %p264, %p265
    %s268 = sadd.s32 %s267, 1
    %p271 = scmp.eq.s32.totalorder %s23, 1
    %p272 = scmp.ne.s32.totalorder %s267, %s269
    %p273 = scmp.eq.s32.totalorder %s23, 0
    %p274 = por %p272, %p273
    %p275 = scmp.ne.s32.totalorder %s267, %s269
    %p276 = scmp.eq.s32.totalorder %s28, 1
    %p277 = por %p275, %p276
    %p278 = scmp.ne.s32.totalorder %s269, %s270
    %p279 = scmp.eq.s32.totalorder %s28, 0
    %p280 = por %p278, %p279
    %p281 = scmp.ne.s32.totalorder %s269, %s270
    %p282 = scmp.eq.s32.totalorder %s29, 1
    %p283 = por %p281, %p282
    %p285 = scmp.ne.s32.totalorder %s270, %s284
    %p286 = scmp.eq.s32.totalorder %s29, 0
    %p287 = por %p285, %p286
    %s289 = sadd.s32 %s288, 1
    %p292 = scmp.eq.s32.totalorder %s23, 1
    %p293 = scmp.ne.s32.totalorder %s288, %s290
    %p294 = scmp.eq.s32.totalorder %s23, 0
    %p295 = por %p293, %p294
    %p296 = scmp.ne.s32.totalorder %s288, %s290
    %p297 = scmp.eq.s32.totalorder %s28, 1
    %p298 = por %p296, %p297
    %p299 = scmp.ne.s32.totalorder %s290, %s291
    %p300 = scmp.eq.s32.totalorder %s28, 0
    %p301 = por %p299, %p300
    %p302 = scmp.ne.s32.totalorder %s290, %s291
    %p303 = scmp.eq.s32.totalorder %s29, 1
    %p304 = por %p302, %p303
    %p306 = scmp.ne.s32.totalorder %s291, %s305
    %p307 = scmp.eq.s32.totalorder %s29, 0
    %p308 = por %p306, %p307
    %s310 = sadd.s32 %s309, 1
    %p313 = scmp.eq.s32.totalorder %s23, 1
    %p314 = scmp.ne.s32.totalorder %s309, %s311
    %p315 = scmp.eq.s32.totalorder %s23, 0
    %p316 = por %p314, %p315
    %p317 = scmp.ne.s32.totalorder %s309, %s311
    %p318 = scmp.eq.s32.totalorder %s28, 1
    %p319 = por %p317, %p318
    %p320 = scmp.ne.s32.totalorder %s311, %s312
    %p321 = scmp.eq.s32.totalorder %s28, 0
    %p322 = por %p320, %p321
    %p323 = scmp.ne.s32.totalorder %s311, %s312
    %p324 = scmp.eq.s32.totalorder %s29, 1
    %p325 = por %p323, %p324
    %p327 = scmp.ne.s32.totalorder %s312, %s326
    %p328 = scmp.eq.s32.totalorder %s29, 0
    %p329 = por %p327, %p328
    %s331 = sadd.s32 %s330, 1
    %p334 = scmp.eq.s32.totalorder %s23, 1
    %p335 = scmp.ne.s32.totalorder %s330, %s332
    %p336 = scmp.eq.s32.totalorder %s23, 0
    %p337 = por %p335, %p336
    %p338 = scmp.ne.s32.totalorder %s330, %s332
    %p339 = scmp.eq.s32.totalorder %s28, 1
    %p340 = por %p338, %p339
    %p341 = scmp.ne.s32.totalorder %s332, %s333
    %p342 = scmp.eq.s32.totalorder %s28, 0
    %p343 = por %p341, %p342
    %p344 = scmp.ne.s32.totalorder %s332, %s333
    %p345 = scmp.eq.s32.totalorder %s29, 1
    %p346 = por %p344, %p345
    %p348 = scmp.ne.s32.totalorder %s333, %s347
    %p349 = scmp.eq.s32.totalorder %s29, 0
    %p350 = por %p348, %p349
    %s352 = sadd.s32 %s351, 1
    %p355 = scmp.eq.s32.totalorder %s23, 1
    %p356 = scmp.ne.s32.totalorder %s351, %s353
    %p357 = scmp.eq.s32.totalorder %s23, 0
    %p358 = por %p356, %p357
    %p359 = scmp.ne.s32.totalorder %s351, %s353
    %p360 = scmp.eq.s32.totalorder %s28, 1
    %p361 = por %p359, %p360
    %p362 = scmp.ne.s32.totalorder %s353, %s354
    %p363 = scmp.eq.s32.totalorder %s28, 0
    %p364 = por %p362, %p363
    %p365 = scmp.ne.s32.totalorder %s353, %s354
    %p366 = scmp.eq.s32.totalorder %s29, 1
    %p367 = por %p365, %p366
    %p369 = scmp.ne.s32.totalorder %s354, %s368
    %p370 = scmp.eq.s32.totalorder %s29, 0
    %p371 = por %p369, %p370
    %s373 = sadd.s32 %s372, 1
    %p376 = scmp.eq.s32.totalorder %s23, 1
    %p377 = scmp.ne.s32.totalorder %s372, %s374
    %p378 = scmp.eq.s32.totalorder %s23, 0
    %p379 = por %p377, %p378
    %p380 = scmp.ne.s32.totalorder %s372, %s374
    %p381 = scmp.eq.s32.totalorder %s28, 1
    %p382 = por %p380, %p381
    %p383 = scmp.ne.s32.totalorder %s374, %s375
    %p384 = scmp.eq.s32.totalorder %s28, 0
    %p385 = por %p383, %p384
    %p386 = scmp.ne.s32.totalorder %s374, %s375
    %p387 = scmp.eq.s32.totalorder %s29, 1
    %p388 = por %p386, %p387
    %p390 = scmp.ne.s32.totalorder %s375, %s389
    %p391 = scmp.eq.s32.totalorder %s29, 0
    %p392 = por %p390, %p391
    %s393 = ssub.s32 %s23, %s30
    %p394 = scmp.eq.s32.totalorder %s393, 0
    %s396 = sadd.s32 %s395, 1
    %s397 = scalar_select %p394, %s395, %s396
    %p400 = pneg %p394
    %p401 = scmp.eq.s32.totalorder %s23, 1
    %p402 = por %p400, %p401
    %p403 = scmp.ne.s32.totalorder %s395, %s398
    %p404 = scmp.eq.s32.totalorder %s23, 0
    %p405 = por %p403, %p404
    %p406 = scmp.ne.s32.totalorder %s395, %s398
    %p407 = scmp.eq.s32.totalorder %s28, 1
    %p408 = por %p406, %p407
    %p409 = scmp.ne.s32.totalorder %s398, %s399
    %p410 = scmp.eq.s32.totalorder %s28, 0
    %p411 = por %p409, %p410
    %p412 = scmp.ne.s32.totalorder %s398, %s399
    %p413 = scmp.eq.s32.totalorder %s29, 1
    %p414 = por %p412, %p413
    %p416 = scmp.ne.s32.totalorder %s399, %s415
    %p417 = scmp.eq.s32.totalorder %s29, 0
    %p418 = por %p416, %p417
    %p419 = scmp.le.s32.totalorder 1, %s23
    %p420 = scmp.lt.s32.totalorder %s23, 3
    %p421 = pnand %p419, %p420
    %p422 = pneg %p421
    // Predicated region
    $region9: #{tpu_custom_call.1} parent=5 // pred_check
      _
    $region10: #{tpu_custom_call.1} parent=5 // pred_check_branch
      %424 = sbr.rel (%p421) target = $region12
    $region11: #{tpu_custom_call.1} parent=5 // pred_region
      %s425 = ssub.s32 %s23, 1
      // Predicated region
      $region13: #{tpu_custom_call.1} parent=11 // pred_check
        %p426 = pneg %p70
      $region14: #{tpu_custom_call.1} parent=11 // pred_check_branch
        %428 = sbr.rel (%p426) target = $region16
      $region15: #{tpu_custom_call.1} parent=11 // pred_region
        _
      $region16: #{tpu_custom_call.1} parent=11 // pred_fallthru
        _
      // Predicated region
      $region17: #{tpu_custom_call.1} parent=11 // pred_check
        %p429 = pneg %p91
      $region18: #{tpu_custom_call.1} parent=11 // pred_check_branch
        %431 = sbr.rel (%p429) target = $region20
      $region19: #{tpu_custom_call.1} parent=11 // pred_region
        _
      $region20: #{tpu_custom_call.1} parent=11 // pred_fallthru
        _
      // Predicated region
      $region21: #{tpu_custom_call.1} parent=11 // pred_check
        %p432 = pneg %p112
      $region22: #{tpu_custom_call.1} parent=11 // pred_check_branch
        %434 = sbr.rel (%p432) target = $region24
      $region23: #{tpu_custom_call.1} parent=11 // pred_region
        _
      $region24: #{tpu_custom_call.1} parent=11 // pred_fallthru
        _
      // Predicated region
      $region25: #{tpu_custom_call.1} parent=11 // pred_check
        %p435 = pneg %p133
      $region26: #{tpu_custom_call.1} parent=11 // pred_check_branch
        %437 = sbr.rel (%p435) target = $region28
      $region27: #{tpu_custom_call.1} parent=11 // pred_region
        _
      $region28: #{tpu_custom_call.1} parent=11 // pred_fallthru
        _
      // Predicated region
      $region29: #{tpu_custom_call.1} parent=11 // pred_check
        %p438 = pneg %p154
      $region30: #{tpu_custom_call.1} parent=11 // pred_check_branch
        %440 = sbr.rel (%p438) target = $region32
      $region31: #{tpu_custom_call.1} parent=11 // pred_region
        _
      $region32: #{tpu_custom_call.1} parent=11 // pred_fallthru
        _
      // Predicated region
      $region33: #{tpu_custom_call.1} parent=11 // pred_check
        %p441 = pneg %p175
      $region34: #{tpu_custom_call.1} parent=11 // pred_check_branch
        %443 = sbr.rel (%p441) target = $region36
      $region35: #{tpu_custom_call.1} parent=11 // pred_region
        _
      $region36: #{tpu_custom_call.1} parent=11 // pred_fallthru
        _
      // Predicated region
      $region37: #{tpu_custom_call.1} parent=11 // pred_check
        %p444 = pneg %p196
      $region38: #{tpu_custom_call.1} parent=11 // pred_check_branch
        %446 = sbr.rel (%p444) target = $region40
      $region39: #{tpu_custom_call.1} parent=11 // pred_region
        _
      $region40: #{tpu_custom_call.1} parent=11 // pred_fallthru
        _
      // Predicated region
      $region41: #{tpu_custom_call.1} parent=11 // pred_check
        %p447 = pneg %p217
      $region42: #{tpu_custom_call.1} parent=11 // pred_check_branch
        %449 = sbr.rel (%p447) target = $region44
      $region43: #{tpu_custom_call.1} parent=11 // pred_region
        _
      $region44: #{tpu_custom_call.1} parent=11 // pred_fallthru
        _
      // Predicated region
      $region45: #{tpu_custom_call.1} parent=11 // pred_check
        %p450 = pneg %p238
      $region46: #{tpu_custom_call.1} parent=11 // pred_check_branch
        %452 = sbr.rel (%p450) target = $region48
      $region47: #{tpu_custom_call.1} parent=11 // pred_region
        _
      $region48: #{tpu_custom_call.1} parent=11 // pred_fallthru
        _
      // Predicated region
      $region49: #{tpu_custom_call.1} parent=11 // pred_check
        %p453 = pneg %p259
      $region50: #{tpu_custom_call.1} parent=11 // pred_check_branch
        %455 = sbr.rel (%p453) target = $region52
      $region51: #{tpu_custom_call.1} parent=11 // pred_region
        _
      $region52: #{tpu_custom_call.1} parent=11 // pred_fallthru
        _
      // Predicated region
      $region53: #{tpu_custom_call.1} parent=11 // pred_check
        %p456 = pneg %p280
      $region54: #{tpu_custom_call.1} parent=11 // pred_check_branch
        %458 = sbr.rel (%p456) target = $region56
      $region55: #{tpu_custom_call.1} parent=11 // pred_region
        _
      $region56: #{tpu_custom_call.1} parent=11 // pred_fallthru
        _
      // Predicated region
      $region57: #{tpu_custom_call.1} parent=11 // pred_check
        %p459 = pneg %p301
      $region58: #{tpu_custom_call.1} parent=11 // pred_check_branch
        %461 = sbr.rel (%p459) target = $region60
      $region59: #{tpu_custom_call.1} parent=11 // pred_region
        _
      $region60: #{tpu_custom_call.1} parent=11 // pred_fallthru
        _
      // Predicated region
      $region61: #{tpu_custom_call.1} parent=11 // pred_check
        %p462 = pneg %p322
      $region62: #{tpu_custom_call.1} parent=11 // pred_check_branch
        %464 = sbr.rel (%p462) target = $region64
      $region63: #{tpu_custom_call.1} parent=11 // pred_region
        _
      $region64: #{tpu_custom_call.1} parent=11 // pred_fallthru
        _
      // Predicated region
      $region65: #{tpu_custom_call.1} parent=11 // pred_check
        %p465 = pneg %p343
      $region66: #{tpu_custom_call.1} parent=11 // pred_check_branch
        %467 = sbr.rel (%p465) target = $region68
      $region67: #{tpu_custom_call.1} parent=11 // pred_region
        _
      $region68: #{tpu_custom_call.1} parent=11 // pred_fallthru
        _
      // Predicated region
      $region69: #{tpu_custom_call.1} parent=11 // pred_check
        %p468 = pneg %p364
      $region70: #{tpu_custom_call.1} parent=11 // pred_check_branch
        %470 = sbr.rel (%p468) target = $region72
      $region71: #{tpu_custom_call.1} parent=11 // pred_region
        _
      $region72: #{tpu_custom_call.1} parent=11 // pred_fallthru
        _
      // Predicated region
      $region73: #{tpu_custom_call.1} parent=11 // pred_check
        %p471 = pneg %p385
      $region74: #{tpu_custom_call.1} parent=11 // pred_check_branch
        %473 = sbr.rel (%p471) target = $region76
      $region75: #{tpu_custom_call.1} parent=11 // pred_region
        _
      $region76: #{tpu_custom_call.1} parent=11 // pred_fallthru
        _
    $region12: #{tpu_custom_call.1} parent=5 // pred_fallthru
      _
    %p474 = scmp.lt.s32.totalorder %s23, 2
    // Predicated region
    $region77: #{tpu_custom_call.1} parent=5 // pred_check
      %p475 = pneg %p474
    $region78: #{tpu_custom_call.1} parent=5 // pred_check_branch
      %477 = sbr.rel (%p475) target = $region80
    $region79: #{tpu_custom_call.1} parent=5 // pred_region
      // Predicated region
      $region81: #{tpu_custom_call.1} parent=79 // pred_check
        %p478 = pneg %p43
      $region82: #{tpu_custom_call.1} parent=79 // pred_check_branch
        %480 = sbr.rel (%p478) target = $region84
      $region83: #{tpu_custom_call.1} parent=79 // pred_region
        %p481 = scmp.lt.s32.totalorder %s23, 1
        %s482 = scalar_select %p481, %s23, 1
        %s483 = smul.addr %s482, 2
        %s484 = smul.addr %s483, 4
        %s485 = scalar_lea.vmem %s0, %s484
      $region84: #{tpu_custom_call.1} parent=79 // pred_fallthru
        _
    $region80: #{tpu_custom_call.1} parent=5 // pred_fallthru
      _
    %p486 = scmp.le.s32.totalorder 1, %s23
    %p487 = scmp.lt.s32.totalorder %s23, 3
    %p488 = pnand %p486, %p487
    %p489 = pneg %p488
    // Predicated region
    $region85: #{tpu_custom_call.1} parent=5 // pred_check
      _
    $region86: #{tpu_custom_call.1} parent=5 // pred_check_branch
      %491 = sbr.rel (%p488) target = $region88
    $region87: #{tpu_custom_call.1} parent=5 // pred_region
      %s492 = ssub.s32 %s23, 1
      %p493 = scmp.lt.s32.totalorder %s28, 1
      %s494 = scalar_select %p493, %s28, 1
      %s495 = smul.addr %s494, 2
      %s496 = smul.addr %s495, 4
      %s497 = scalar_lea.vmem %s0, %s496
      %p498 = pneg %p49
      %p499 = pneg %p46
      %p500 = pneg %p70
      %p501 = pneg %p67
      %p502 = pneg %p91
      %p503 = pneg %p88
      %p504 = pneg %p112
      %p505 = pneg %p109
      %p506 = pneg %p133
      %p507 = pneg %p130
      %p508 = pneg %p154
      %p509 = pneg %p151
      %p510 = pneg %p175
      %p511 = pneg %p172
      %p512 = pneg %p196
      %p513 = pneg %p193
      %p514 = pneg %p217
      %p515 = pneg %p214
      %p516 = pneg %p238
      %p517 = pneg %p235
      %p518 = pneg %p259
      %p519 = pneg %p256
      %p520 = pneg %p280
      %p521 = pneg %p277
      %p522 = pneg %p301
      %p523 = pneg %p298
      %p524 = pneg %p322
      %p525 = pneg %p319
      %p526 = pneg %p343
      %p527 = pneg %p340
      %p528 = pneg %p364
      %p529 = pneg %p361
      %p530 = pneg %p385
      %p531 = pneg %p382
      %p532 = pneg %p411
      %p533 = pneg %p408
      %p534 = scmp.lt.s32.totalorder %s28, 1
      %s535 = scalar_select %p534, %s28, 1
      %s536 = smul.addr %s535, 2
      %s537 = smul.addr %s536, 8
      %s538 = scalar_lea.vmem %s17, %s537
      %p539 = scmp.lt.s32.totalorder %s28, 1
      %s540 = scalar_select %p539, %s28, 1
      %s541 = smul.addr %s540, 2
      %s542 = smul.addr %s541, 4
      %s543 = scalar_lea.vmem %s0, %s542
      %p544 = scmp.lt.s32.totalorder %s28, 1
      %s545 = scalar_select %p544, %s28, 1
      %s546 = smul.addr %s545, 2
      %s547 = smul.addr %s546, 8
      %s548 = scalar_lea.vmem %s17, %s547
      %v549 = vld [vmem:[%s543] sm:$0xff]
      %v551 = vcombine.high %v549, %v549
      %552 = vrot.lane.b32.xlu0 %v549, 2
      %v553 = vpop.permute.xlu0 %552
      %554 = vrot.lane.b32.xlu0 %v551, 2
      %v555 = vpop.permute.xlu0 %554
      %vm556 = vcmask 15360
      %v557 = vsel %vm556, %v553, %v555
      %v560 = vsel %vm556, 0.0, %v553
      %v562 = vrot.slane %v560, 4
      %v563 = vrot.slane %v557, 4
      %v564 = vrot.slane %v555, 4
      %565 = vrot.lane.b32.xlu0 %v562, 127
      %v566 = vpop.permute.xlu0 %565
      %567 = vrot.lane.b32.xlu0 %v563, 127
      %v568 = vpop.permute.xlu0 %567
      %569 = vrot.lane.b32.xlu0 %v564, 127
      %v570 = vpop.permute.xlu0 %569
      %vm571 = vcmask 1039360
      %v572 = vsel %vm571, %v566, %v568
      %v573 = vsel %vm571, %v568, %v570
      %576 = vrot.lane.b32.xlu0 %v560, 126
      %v577 = vpop.permute.xlu0 %576
      %578 = vrot.lane.b32.xlu0 %v557, 126
      %v579 = vpop.permute.xlu0 %578
      %580 = vrot.lane.b32.xlu0 %v555, 126
      %v581 = vpop.permute.xlu0 %580
      %vm582 = vcmask 1031168
      %v583 = vsel %vm582, %v577, %v579
      %v584 = vsel %vm582, %v579, %v581
      %vm585 = vcmask 1043456
      %v586 = vsel %vm585, %v560, %v572
      %v587 = vsel %vm585, %v557, %v573
      %v588 = vld [vmem:[%s1] sm:$0xff]
      %v589 = vld [vmem:[%s2] sm:$0xff]
      %591 = vset.pattern.permute.xlu0 0
      %592 = vperm.xlu0 %591, %v589
      %v593 = vpop.permute.xlu0 %592
      %vm595 = vcmask 97280
      %v597 = vsel %vm595, %v588, 0
      %v599 = vsel %vm585, %v583, 0
      %v601 = vsel %vm585, %v584, 0
      %603 = vmatprep.subr.mxu0 %v587
      %604 = vmatpush1.msra.mxu0 %v586
      %605 = vmatprep.subr.mxu0 %v601
      %606 = vmatpush1.msra.mxu0 %v599
      %607 = vmatprep.subr.mxu0 0.0
      %608 = vmatpush1.msra.mxu0 0.0
      %609 = vmatprep.subr.mxu0 0.0
      %610 = vmatpush1.msra.mxu0 0.0
      %611 = vmatprep.subr.mxu0 0.0
      %612 = vmatpush1.msra.mxu0 0.0
      %613 = vmatprep.subr.mxu0 0.0
      %614 = vmatpush1.msra.mxu0 0.0
      %615 = vmatprep.subr.mxu0 0.0
      %616 = vmatpush1.msra.mxu0 0.0
      %617 = vmatprep.subr.mxu0 0.0
      %618 = vmatpush1.msra.mxu0 0.0
      %619 = vmatprep.subr.mxu0 0.0
      %620 = vmatpush1.msra.mxu0 0.0
      %621 = vmatprep.subr.mxu0 0.0
      %622 = vmatpush1.msra.mxu0 0.0
      %623 = vmatprep.subr.mxu0 0.0
      %624 = vmatpush1.msra.mxu0 0.0
      %625 = vmatprep.subr.mxu0 0.0
      %626 = vmatpush1.msra.mxu0 0.0
      %627 = vmatprep.subr.mxu0 0.0
      %628 = vmatpush1.msra.mxu0 0.0
      %629 = vmatprep.subr.mxu0 0.0
      %630 = vmatpush1.msra.mxu0 0.0
      %631 = vmatprep.subr.mxu0 0.0
      %632 = vmatpush1.msra.mxu0 0.0
      %633 = vmatprep.subr.mxu0 0.0
      %634 = vmatpush1.msra.mxu0 0.0
      %635 = vmatprep.subr.mxu0 0.0
      %636 = vmatpush1.msra.mxu0 0.0
      %637 = vmatprep.subr.mxu0 0.0
      %638 = vmatpush1.msra.mxu0 0.0
      %639 = vmatprep.subr.mxu0 0.0
      %640 = vmatpush1.msra.mxu0 0.0
      %641 = vmatprep.subr.mxu0 0.0
      %642 = vmatpush1.msra.mxu0 0.0
      %643 = vmatprep.subr.mxu0 0.0
      %644 = vmatpush1.msra.mxu0 0.0
      %645 = vmatprep.subr.mxu0 0.0
      %646 = vmatpush1.msra.mxu0 0.0
      %647 = vmatprep.subr.mxu0 0.0
      %648 = vmatpush1.msra.mxu0 0.0
      %649 = vmatprep.subr.mxu0 0.0
      %650 = vmatpush1.msra.mxu0 0.0
      %651 = vmatprep.subr.mxu0 0.0
      %652 = vmatpush1.msra.mxu0 0.0
      %653 = vmatprep.subr.mxu0 0.0
      %654 = vmatpush1.msra.mxu0 0.0
      %655 = vmatprep.subr.mxu0 0.0
      %656 = vmatpush1.msra.mxu0 0.0
      %657 = vmatprep.subr.mxu0 0.0
      %658 = vmatpush1.msra.mxu0 0.0
      %659 = vmatprep.subr.mxu0 0.0
      %660 = vmatpush1.msra.mxu0 0.0
      %661 = vmatprep.subr.mxu0 0.0
      %662 = vmatpush1.msra.mxu0 0.0
      %663 = vmatprep.subr.mxu0 0.0
      %664 = vmatpush1.msra.mxu0 0.0
      %665 = vmatprep.subr.mxu0 0.0
      %666 = vmatpush1.msra.mxu0 0.0
      %667 = vmatprep.mubr.f32.mxu0 0.0
      %668 = vmatmul.mubr.f32.gmra.mrb[0].mxu0 %v597
      %v669 = vpop.f32.mrb[0].mxu0
      %v670 = vadd.f32 %v593, %v669
      %v671 = vpop.f32.mrb[0].mxu0
      %v672 = vadd.f32 %v593, %v671
      %673 = vdwg.mxu0
      %vm674 = vcmp.gt.f32.partialorder %v670, 0.0
      %vm675 = vcmp.gt.f32.partialorder %v672, 0.0
      %v676 = vmul.f32 %v670, 0.01
      %v677 = vmul.f32 %v672, 0.01
      %v678 = vsel %vm674, %v670, %v676
      %v679 = vsel %vm675, %v672, %v677
      %682 = vrot.lane.b32.xlu0 %v678, 2
      %v683 = vpop.permute.xlu0 %682
      %684 = vrot.lane.b32.xlu0 %v679, 2
      %v685 = vpop.permute.xlu0 %684
      %v686 = vsel %vm556, %v683, %v685
      %v689 = vsel %vm556, 0.0, %v683
      %691 = vrot.lane.b32.xlu0 %v689, 127
      %v692 = vpop.permute.xlu0 %691
      %693 = vrot.lane.b32.xlu0 %v686, 127
      %v694 = vpop.permute.xlu0 %693
      %695 = vrot.lane.b32.xlu0 %v685, 127
      %v696 = vpop.permute.xlu0 %695
      %v697 = vsel %vm571, %v692, %v694
      %v698 = vsel %vm571, %v694, %v696
      %701 = vrot.lane.b32.xlu0 %v689, 126
      %v702 = vpop.permute.xlu0 %701
      %703 = vrot.lane.b32.xlu0 %v686, 126
      %v704 = vpop.permute.xlu0 %703
      %705 = vrot.lane.b32.xlu0 %v685, 126
      %v706 = vpop.permute.xlu0 %705
      %v707 = vsel %vm582, %v702, %v704
      %v708 = vsel %vm582, %v704, %v706
      %v711 = vld [vmem:[%s3] sm:$0xff]
      %v712 = vld [vmem:[%s4] sm:$0xff]
      %714 = vset.pattern.permute.xlu0 0
      %715 = vperm.xlu0 %714, %v712
      %v716 = vpop.permute.xlu0 %715
      %vm718 = vcmask 195584
      %v720 = vsel %vm718, %v711, 0
      %722 = vmatprep.subr.mxu0 %v686
      %723 = vmatpush1.msra.mxu0 %v689
      %724 = vmatprep.subr.mxu0 %v698
      %725 = vmatpush1.msra.mxu0 %v697
      %726 = vmatprep.subr.mxu0 %v708
      %727 = vmatpush1.msra.mxu0 %v707
      %728 = vmatprep.subr.mxu0 0.0
      %729 = vmatpush1.msra.mxu0 0.0
      %730 = vmatprep.subr.mxu0 0.0
      %731 = vmatpush1.msra.mxu0 0.0
      %732 = vmatprep.subr.mxu0 0.0
      %733 = vmatpush1.msra.mxu0 0.0
      %734 = vmatprep.subr.mxu0 0.0
      %735 = vmatpush1.msra.mxu0 0.0
      %736 = vmatprep.subr.mxu0 0.0
      %737 = vmatpush1.msra.mxu0 0.0
      %738 = vmatprep.subr.mxu0 0.0
      %739 = vmatpush1.msra.mxu0 0.0
      %740 = vmatprep.subr.mxu0 0.0
      %741 = vmatpush1.msra.mxu0 0.0
      %742 = vmatprep.subr.mxu0 0.0
      %743 = vmatpush1.msra.mxu0 0.0
      %744 = vmatprep.subr.mxu0 0.0
      %745 = vmatpush1.msra.mxu0 0.0
      %746 = vmatprep.subr.mxu0 0.0
      %747 = vmatpush1.msra.mxu0 0.0
      %748 = vmatprep.subr.mxu0 0.0
      %749 = vmatpush1.msra.mxu0 0.0
      %750 = vmatprep.subr.mxu0 0.0
      %751 = vmatpush1.msra.mxu0 0.0
      %752 = vmatprep.subr.mxu0 0.0
      %753 = vmatpush1.msra.mxu0 0.0
      %754 = vmatprep.subr.mxu0 0.0
      %755 = vmatpush1.msra.mxu0 0.0
      %756 = vmatprep.subr.mxu0 0.0
      %757 = vmatpush1.msra.mxu0 0.0
      %758 = vmatprep.subr.mxu0 0.0
      %759 = vmatpush1.msra.mxu0 0.0
      %760 = vmatprep.subr.mxu0 0.0
      %761 = vmatpush1.msra.mxu0 0.0
      %762 = vmatprep.subr.mxu0 0.0
      %763 = vmatpush1.msra.mxu0 0.0
      %764 = vmatprep.subr.mxu0 0.0
      %765 = vmatpush1.msra.mxu0 0.0
      %766 = vmatprep.subr.mxu0 0.0
      %767 = vmatpush1.msra.mxu0 0.0
      %768 = vmatprep.subr.mxu0 0.0
      %769 = vmatpush1.msra.mxu0 0.0
      %770 = vmatprep.subr.mxu0 0.0
      %771 = vmatpush1.msra.mxu0 0.0
      %772 = vmatprep.subr.mxu0 0.0
      %773 = vmatpush1.msra.mxu0 0.0
      %774 = vmatprep.subr.mxu0 0.0
      %775 = vmatpush1.msra.mxu0 0.0
      %776 = vmatprep.subr.mxu0 0.0
      %777 = vmatpush1.msra.mxu0 0.0
      %778 = vmatprep.subr.mxu0 0.0
      %779 = vmatpush1.msra.mxu0 0.0
      %780 = vmatprep.subr.mxu0 0.0
      %781 = vmatpush1.msra.mxu0 0.0
      %782 = vmatprep.subr.mxu0 0.0
      %783 = vmatpush1.msra.mxu0 0.0
      %784 = vmatprep.subr.mxu0 0.0
      %785 = vmatpush1.msra.mxu0 0.0
      %786 = vmatprep.mubr.f32.mxu0 0.0
      %787 = vmatmul.mubr.f32.gmra.mrb[0].mxu0 %v720
      %v788 = vpop.f32.mrb[0].mxu0
      %v789 = vadd.f32 %v716, %v788
      %v790 = vpop.f32.mrb[0].mxu0
      %v791 = vadd.f32 %v716, %v790
      %792 = vdwg.mxu0
      %vm793 = vcmp.gt.f32.partialorder %v789, 0.0
      %vm794 = vcmp.gt.f32.partialorder %v791, 0.0
      %v795 = vmul.f32 %v789, 0.01
      %v796 = vmul.f32 %v791, 0.01
      %v797 = vsel %vm793, %v789, %v795
      %v798 = vsel %vm794, %v791, %v796
      %v799 = vld [vmem:[%s5] sm:$0xff]
      %v800 = vld [vmem:[%s6] sm:$0xff]
      %802 = vset.pattern.permute.xlu0 0
      %803 = vperm.xlu0 %802, %v800
      %v804 = vpop.permute.xlu0 %803
      %vm806 = vcmask 31744
      %v808 = vsel %vm806, %v799, 0
      %v810 = vsel %vm585, %v549, 0
      %v812 = vsel %vm585, %v551, 0
      %814 = vmatprep.subr.mxu0 %v812
      %815 = vmatpush1.msra.mxu0 %v810
      %816 = vmatprep.subr.mxu0 0.0
      %817 = vmatpush1.msra.mxu0 0.0
      %818 = vmatprep.subr.mxu0 0.0
      %819 = vmatpush1.msra.mxu0 0.0
      %820 = vmatprep.subr.mxu0 0.0
      %821 = vmatpush1.msra.mxu0 0.0
      %822 = vmatprep.subr.mxu0 0.0
      %823 = vmatpush1.msra.mxu0 0.0
      %824 = vmatprep.subr.mxu0 0.0
      %825 = vmatpush1.msra.mxu0 0.0
      %826 = vmatprep.subr.mxu0 0.0
      %827 = vmatpush1.msra.mxu0 0.0
      %828 = vmatprep.subr.mxu0 0.0
      %829 = vmatpush1.msra.mxu0 0.0
      %830 = vmatprep.subr.mxu0 0.0
      %831 = vmatpush1.msra.mxu0 0.0
      %832 = vmatprep.subr.mxu0 0.0
      %833 = vmatpush1.msra.mxu0 0.0
      %834 = vmatprep.subr.mxu0 0.0
      %835 = vmatpush1.msra.mxu0 0.0
      %836 = vmatprep.subr.mxu0 0.0
      %837 = vmatpush1.msra.mxu0 0.0
      %838 = vmatprep.subr.mxu0 0.0
      %839 = vmatpush1.msra.mxu0 0.0
      %840 = vmatprep.subr.mxu0 0.0
      %841 = vmatpush1.msra.mxu0 0.0
      %842 = vmatprep.subr.mxu0 0.0
      %843 = vmatpush1.msra.mxu0 0.0
      %844 = vmatprep.subr.mxu0 0.0
      %845 = vmatpush1.msra.mxu0 0.0
      %846 = vmatprep.subr.mxu0 0.0
      %847 = vmatpush1.msra.mxu0 0.0
      %848 = vmatprep.subr.mxu0 0.0
      %849 = vmatpush1.msra.mxu0 0.0
      %850 = vmatprep.subr.mxu0 0.0
      %851 = vmatpush1.msra.mxu0 0.0
      %852 = vmatprep.subr.mxu0 0.0
      %853 = vmatpush1.msra.mxu0 0.0
      %854 = vmatprep.subr.mxu0 0.0
      %855 = vmatpush1.msra.mxu0 0.0
      %856 = vmatprep.subr.mxu0 0.0
      %857 = vmatpush1.msra.mxu0 0.0
      %858 = vmatprep.subr.mxu0 0.0
      %859 = vmatpush1.msra.mxu0 0.0
      %860 = vmatprep.subr.mxu0 0.0
      %861 = vmatpush1.msra.mxu0 0.0
      %862 = vmatprep.subr.mxu0 0.0
      %863 = vmatpush1.msra.mxu0 0.0
      %864 = vmatprep.subr.mxu0 0.0
      %865 = vmatpush1.msra.mxu0 0.0
      %866 = vmatprep.subr.mxu0 0.0
      %867 = vmatpush1.msra.mxu0 0.0
      %868 = vmatprep.subr.mxu0 0.0
      %869 = vmatpush1.msra.mxu0 0.0
      %870 = vmatprep.subr.mxu0 0.0
      %871 = vmatpush1.msra.mxu0 0.0
      %872 = vmatprep.subr.mxu0 0.0
      %873 = vmatpush1.msra.mxu0 0.0
      %874 = vmatprep.subr.mxu0 0.0
      %875 = vmatpush1.msra.mxu0 0.0
      %876 = vmatprep.subr.mxu0 0.0
      %877 = vmatpush1.msra.mxu0 0.0
      %878 = vmatprep.mubr.f32.mxu0 0.0
      %879 = vmatmul.mubr.f32.gmra.mrb[0].mxu0 %v808
      %v880 = vpop.f32.mrb[0].mxu0
      %v881 = vadd.f32 %v804, %v880
      %v882 = vpop.f32.mrb[0].mxu0
      %v883 = vadd.f32 %v804, %v882
      %884 = vdwg.mxu0
      %v885 = vadd.f32 %v797, %v881
      %v886 = vadd.f32 %v798, %v883
      %889 = vrot.lane.b32.xlu0 %v885, 4
      %v890 = vpop.permute.xlu0 %889
      %891 = vrot.lane.b32.xlu0 %v886, 4
      %v892 = vpop.permute.xlu0 %891
      %v893 = vsel %vm806, %v890, %v892
      %v896 = vsel %vm806, 0.0, %v890
      %898 = vrot.lane.b32.xlu0 %v896, 126
      %v899 = vpop.permute.xlu0 %898
      %900 = vrot.lane.b32.xlu0 %v893, 126
      %v901 = vpop.permute.xlu0 %900
      %902 = vrot.lane.b32.xlu0 %v892, 126
      %v903 = vpop.permute.xlu0 %902
      %v904 = vsel %vm582, %v899, %v901
      %v905 = vsel %vm582, %v901, %v903
      %908 = vrot.lane.b32.xlu0 %v896, 124
      %v909 = vpop.permute.xlu0 %908
      %910 = vrot.lane.b32.xlu0 %v893, 124
      %v911 = vpop.permute.xlu0 %910
      %912 = vrot.lane.b32.xlu0 %v892, 124
      %v913 = vpop.permute.xlu0 %912
      %vm914 = vcmask 1014784
      %v915 = vsel %vm914, %v909, %v911
      %v916 = vsel %vm914, %v911, %v913
      %v919 = vld [vmem:[%s7] sm:$0xff]
      %v920 = vld [vmem:[%s8] sm:$0xff]
      %922 = vset.pattern.permute.xlu0 0
      %923 = vperm.xlu0 %922, %v920
      %v924 = vpop.permute.xlu0 %923
      %v927 = vsel %vm718, %v919, 0
      %929 = vmatprep.subr.mxu0 %v893
      %930 = vmatpush1.msra.mxu0 %v896
      %931 = vmatprep.subr.mxu0 %v905
      %932 = vmatpush1.msra.mxu0 %v904
      %933 = vmatprep.subr.mxu0 %v916
      %934 = vmatpush1.msra.mxu0 %v915
      %935 = vmatprep.subr.mxu0 0.0
      %936 = vmatpush1.msra.mxu0 0.0
      %937 = vmatprep.subr.mxu0 0.0
      %938 = vmatpush1.msra.mxu0 0.0
      %939 = vmatprep.subr.mxu0 0.0
      %940 = vmatpush1.msra.mxu0 0.0
      %941 = vmatprep.subr.mxu0 0.0
      %942 = vmatpush1.msra.mxu0 0.0
      %943 = vmatprep.subr.mxu0 0.0
      %944 = vmatpush1.msra.mxu0 0.0
      %945 = vmatprep.subr.mxu0 0.0
      %946 = vmatpush1.msra.mxu0 0.0
      %947 = vmatprep.subr.mxu0 0.0
      %948 = vmatpush1.msra.mxu0 0.0
      %949 = vmatprep.subr.mxu0 0.0
      %950 = vmatpush1.msra.mxu0 0.0
      %951 = vmatprep.subr.mxu0 0.0
      %952 = vmatpush1.msra.mxu0 0.0
      %953 = vmatprep.subr.mxu0 0.0
      %954 = vmatpush1.msra.mxu0 0.0
      %955 = vmatprep.subr.mxu0 0.0
      %956 = vmatpush1.msra.mxu0 0.0
      %957 = vmatprep.subr.mxu0 0.0
      %958 = vmatpush1.msra.mxu0 0.0
      %959 = vmatprep.subr.mxu0 0.0
      %960 = vmatpush1.msra.mxu0 0.0
      %961 = vmatprep.subr.mxu0 0.0
      %962 = vmatpush1.msra.mxu0 0.0
      %963 = vmatprep.subr.mxu0 0.0
      %964 = vmatpush1.msra.mxu0 0.0
      %965 = vmatprep.subr.mxu0 0.0
      %966 = vmatpush1.msra.mxu0 0.0
      %967 = vmatprep.subr.mxu0 0.0
      %968 = vmatpush1.msra.mxu0 0.0
      %969 = vmatprep.subr.mxu0 0.0
      %970 = vmatpush1.msra.mxu0 0.0
      %971 = vmatprep.subr.mxu0 0.0
      %972 = vmatpush1.msra.mxu0 0.0
      %973 = vmatprep.subr.mxu0 0.0
      %974 = vmatpush1.msra.mxu0 0.0
      %975 = vmatprep.subr.mxu0 0.0
      %976 = vmatpush1.msra.mxu0 0.0
      %977 = vmatprep.subr.mxu0 0.0
      %978 = vmatpush1.msra.mxu0 0.0
      %979 = vmatprep.subr.mxu0 0.0
      %980 = vmatpush1.msra.mxu0 0.0
      %981 = vmatprep.subr.mxu0 0.0
      %982 = vmatpush1.msra.mxu0 0.0
      %983 = vmatprep.subr.mxu0 0.0
      %984 = vmatpush1.msra.mxu0 0.0
      %985 = vmatprep.subr.mxu0 0.0
      %986 = vmatpush1.msra.mxu0 0.0
      %987 = vmatprep.subr.mxu0 0.0
      %988 = vmatpush1.msra.mxu0 0.0
      %989 = vmatprep.subr.mxu0 0.0
      %990 = vmatpush1.msra.mxu0 0.0
      %991 = vmatprep.subr.mxu0 0.0
      %992 = vmatpush1.msra.mxu0 0.0
      %993 = vmatprep.mubr.f32.mxu0 0.0
      %994 = vmatmul.mubr.f32.gmra.mrb[0].mxu0 %v927
      %v995 = vpop.f32.mrb[0].mxu0
      %v996 = vadd.f32 %v924, %v995
      %v997 = vpop.f32.mrb[0].mxu0
      %v998 = vadd.f32 %v924, %v997
      %999 = vdwg.mxu0
      %vm1000 = vcmp.gt.f32.partialorder %v996, 0.0
      %vm1001 = vcmp.gt.f32.partialorder %v998, 0.0
      %v1002 = vmul.f32 %v996, 0.01
      %v1003 = vmul.f32 %v998, 0.01
      %v1004 = vsel %vm1000, %v996, %v1002
      %v1005 = vsel %vm1001, %v998, %v1003
      %1008 = vrot.lane.b32.xlu0 %v1004, 4
      %v1009 = vpop.permute.xlu0 %1008
      %1010 = vrot.lane.b32.xlu0 %v1005, 4
      %v1011 = vpop.permute.xlu0 %1010
      %v1012 = vsel %vm806, %v1009, %v1011
      %v1015 = vsel %vm806, 0.0, %v1009
      %1017 = vrot.lane.b32.xlu0 %v1015, 126
      %v1018 = vpop.permute.xlu0 %1017
      %1019 = vrot.lane.b32.xlu0 %v1012, 126
      %v1020 = vpop.permute.xlu0 %1019
      %1021 = vrot.lane.b32.xlu0 %v1011, 126
      %v1022 = vpop.permute.xlu0 %1021
      %v1023 = vsel %vm582, %v1018, %v1020
      %v1024 = vsel %vm582, %v1020, %v1022
      %1027 = vrot.lane.b32.xlu0 %v1015, 124
      %v1028 = vpop.permute.xlu0 %1027
      %1029 = vrot.lane.b32.xlu0 %v1012, 124
      %v1030 = vpop.permute.xlu0 %1029
      %1031 = vrot.lane.b32.xlu0 %v1011, 124
      %v1032 = vpop.permute.xlu0 %1031
      %v1033 = vsel %vm914, %v1028, %v1030
      %v1034 = vsel %vm914, %v1030, %v1032
      %v1037 = vld [vmem:[%s9] sm:$0xff]
      %v1038 = vld [vmem:[%s10] sm:$0xff]
      %1040 = vset.pattern.permute.xlu0 0
      %1041 = vperm.xlu0 %1040, %v1038
      %v1042 = vpop.permute.xlu0 %1041
      %v1045 = vsel %vm718, %v1037, 0
      %1047 = vmatprep.subr.mxu0 %v1012
      %1048 = vmatpush1.msra.mxu0 %v1015
      %1049 = vmatprep.subr.mxu0 %v1024
      %1050 = vmatpush1.msra.mxu0 %v1023
      %1051 = vmatprep.subr.mxu0 %v1034
      %1052 = vmatpush1.msra.mxu0 %v1033
      %1053 = vmatprep.subr.mxu0 0.0
      %1054 = vmatpush1.msra.mxu0 0.0
      %1055 = vmatprep.subr.mxu0 0.0
      %1056 = vmatpush1.msra.mxu0 0.0
      %1057 = vmatprep.subr.mxu0 0.0
      %1058 = vmatpush1.msra.mxu0 0.0
      %1059 = vmatprep.subr.mxu0 0.0
      %1060 = vmatpush1.msra.mxu0 0.0
      %1061 = vmatprep.subr.mxu0 0.0
      %1062 = vmatpush1.msra.mxu0 0.0
      %1063 = vmatprep.subr.mxu0 0.0
      %1064 = vmatpush1.msra.mxu0 0.0
      %1065 = vmatprep.subr.mxu0 0.0
      %1066 = vmatpush1.msra.mxu0 0.0
      %1067 = vmatprep.subr.mxu0 0.0
      %1068 = vmatpush1.msra.mxu0 0.0
      %1069 = vmatprep.subr.mxu0 0.0
      %1070 = vmatpush1.msra.mxu0 0.0
      %1071 = vmatprep.subr.mxu0 0.0
      %1072 = vmatpush1.msra.mxu0 0.0
      %1073 = vmatprep.subr.mxu0 0.0
      %1074 = vmatpush1.msra.mxu0 0.0
      %1075 = vmatprep.subr.mxu0 0.0
      %1076 = vmatpush1.msra.mxu0 0.0
      %1077 = vmatprep.subr.mxu0 0.0
      %1078 = vmatpush1.msra.mxu0 0.0
      %1079 = vmatprep.subr.mxu0 0.0
      %1080 = vmatpush1.msra.mxu0 0.0
      %1081 = vmatprep.subr.mxu0 0.0
      %1082 = vmatpush1.msra.mxu0 0.0
      %1083 = vmatprep.subr.mxu0 0.0
      %1084 = vmatpush1.msra.mxu0 0.0
      %1085 = vmatprep.subr.mxu0 0.0
      %1086 = vmatpush1.msra.mxu0 0.0
      %1087 = vmatprep.subr.mxu0 0.0
      %1088 = vmatpush1.msra.mxu0 0.0
      %1089 = vmatprep.subr.mxu0 0.0
      %1090 = vmatpush1.msra.mxu0 0.0
      %1091 = vmatprep.subr.mxu0 0.0
      %1092 = vmatpush1.msra.mxu0 0.0
      %1093 = vmatprep.subr.mxu0 0.0
      %1094 = vmatpush1.msra.mxu0 0.0
      %1095 = vmatprep.subr.mxu0 0.0
      %1096 = vmatpush1.msra.mxu0 0.0
      %1097 = vmatprep.subr.mxu0 0.0
      %1098 = vmatpush1.msra.mxu0 0.0
      %1099 = vmatprep.subr.mxu0 0.0
      %1100 = vmatpush1.msra.mxu0 0.0
      %1101 = vmatprep.subr.mxu0 0.0
      %1102 = vmatpush1.msra.mxu0 0.0
      %1103 = vmatprep.subr.mxu0 0.0
      %1104 = vmatpush1.msra.mxu0 0.0
      %1105 = vmatprep.subr.mxu0 0.0
      %1106 = vmatpush1.msra.mxu0 0.0
      %1107 = vmatprep.subr.mxu0 0.0
      %1108 = vmatpush1.msra.mxu0 0.0
      %1109 = vmatprep.subr.mxu0 0.0
      %1110 = vmatpush1.msra.mxu0 0.0
      %1111 = vmatprep.mubr.f32.mxu0 0.0
      %1112 = vmatmul.mubr.f32.gmra.mrb[0].mxu0 %v1045
      %v1113 = vpop.f32.mrb[0].mxu0
      %v1114 = vadd.f32 %v1042, %v1113
      %v1115 = vpop.f32.mrb[0].mxu0
      %v1116 = vadd.f32 %v1042, %v1115
      %1117 = vdwg.mxu0
      %vm1118 = vcmp.gt.f32.partialorder %v1114, 0.0
      %vm1119 = vcmp.gt.f32.partialorder %v1116, 0.0
      %v1120 = vmul.f32 %v1114, 0.01
      %v1121 = vmul.f32 %v1116, 0.01
      %v1122 = vsel %vm1118, %v1114, %v1120
      %v1123 = vsel %vm1119, %v1116, %v1121
      %v1124 = vadd.f32 %v1122, %v885
      %v1125 = vadd.f32 %v1123, %v886
      %1128 = vrot.lane.b32.xlu0 %v1124, 8
      %v1129 = vpop.permute.xlu0 %1128
      %1130 = vrot.lane.b32.xlu0 %v1125, 8
      %v1131 = vpop.permute.xlu0 %1130
      %vm1132 = vcmask 64512
      %v1133 = vsel %vm1132, %v1129, %v1131
      %v1136 = vsel %vm1132, 0.0, %v1129
      %1138 = vrot.lane.b32.xlu0 %v1136, 124
      %v1139 = vpop.permute.xlu0 %1138
      %1140 = vrot.lane.b32.xlu0 %v1133, 124
      %v1141 = vpop.permute.xlu0 %1140
      %1142 = vrot.lane.b32.xlu0 %v1131, 124
      %v1143 = vpop.permute.xlu0 %1142
      %v1144 = vsel %vm914, %v1139, %v1141
      %v1145 = vsel %vm914, %v1141, %v1143
      %1148 = vrot.lane.b32.xlu0 %v1136, 120
      %v1149 = vpop.permute.xlu0 %1148
      %1150 = vrot.lane.b32.xlu0 %v1133, 120
      %v1151 = vpop.permute.xlu0 %1150
      %1152 = vrot.lane.b32.xlu0 %v1131, 120
      %v1153 = vpop.permute.xlu0 %1152
      %vm1154 = vcmask 982016
      %v1155 = vsel %vm1154, %v1149, %v1151
      %v1156 = vsel %vm1154, %v1151, %v1153
      %v1159 = vld [vmem:[%s11] sm:$0xff]
      %v1160 = vld [vmem:[%s11 + $0x8] sm:$0xff]
      %v1161 = vld [vmem:[%s12] sm:$0xff]
      %v1162 = vld [vmem:[%s12 + $0x8] sm:$0xff]
      %1164 = vset.pattern.permute.xlu0 0
      %1165 = vperm.xlu0 %1164, %v1161
      %v1166 = vpop.permute.xlu0 %1165
      %1169 = vset.pattern.permute.xlu0 0
      %1170 = vperm.xlu0 %1169, %v1162
      %v1171 = vpop.permute.xlu0 %1170
      %v1174 = vsel %vm718, %v1159, 0
      %v1177 = vsel %vm718, %v1160, 0
      %1179 = vmatprep.subr.mxu0 %v1133
      %1180 = vmatpush1.msra.mxu0 %v1136
      %1181 = vmatprep.subr.mxu0 %v1145
      %1182 = vmatpush1.msra.mxu0 %v1144
      %1183 = vmatprep.subr.mxu0 %v1156
      %1184 = vmatpush1.msra.mxu0 %v1155
      %1185 = vmatprep.subr.mxu0 0.0
      %1186 = vmatpush1.msra.mxu0 0.0
      %1187 = vmatprep.subr.mxu0 0.0
      %1188 = vmatpush1.msra.mxu0 0.0
      %1189 = vmatprep.subr.mxu0 0.0
      %1190 = vmatpush1.msra.mxu0 0.0
      %1191 = vmatprep.subr.mxu0 0.0
      %1192 = vmatpush1.msra.mxu0 0.0
      %1193 = vmatprep.subr.mxu0 0.0
      %1194 = vmatpush1.msra.mxu0 0.0
      %1195 = vmatprep.subr.mxu0 0.0
      %1196 = vmatpush1.msra.mxu0 0.0
      %1197 = vmatprep.subr.mxu0 0.0
      %1198 = vmatpush1.msra.mxu0 0.0
      %1199 = vmatprep.subr.mxu0 0.0
      %1200 = vmatpush1.msra.mxu0 0.0
      %1201 = vmatprep.subr.mxu0 0.0
      %1202 = vmatpush1.msra.mxu0 0.0
      %1203 = vmatprep.subr.mxu0 0.0
      %1204 = vmatpush1.msra.mxu0 0.0
      %1205 = vmatprep.subr.mxu0 0.0
      %1206 = vmatpush1.msra.mxu0 0.0
      %1207 = vmatprep.subr.mxu0 0.0
      %1208 = vmatpush1.msra.mxu0 0.0
      %1209 = vmatprep.subr.mxu0 0.0
      %1210 = vmatpush1.msra.mxu0 0.0
      %1211 = vmatprep.subr.mxu0 0.0
      %1212 = vmatpush1.msra.mxu0 0.0
      %1213 = vmatprep.subr.mxu0 0.0
      %1214 = vmatpush1.msra.mxu0 0.0
      %1215 = vmatprep.subr.mxu0 0.0
      %1216 = vmatpush1.msra.mxu0 0.0
      %1217 = vmatprep.subr.mxu0 0.0
      %1218 = vmatpush1.msra.mxu0 0.0
      %1219 = vmatprep.subr.mxu0 0.0
      %1220 = vmatpush1.msra.mxu0 0.0
      %1221 = vmatprep.subr.mxu0 0.0
      %1222 = vmatpush1.msra.mxu0 0.0
      %1223 = vmatprep.subr.mxu0 0.0
      %1224 = vmatpush1.msra.mxu0 0.0
      %1225 = vmatprep.subr.mxu0 0.0
      %1226 = vmatpush1.msra.mxu0 0.0
      %1227 = vmatprep.subr.mxu0 0.0
      %1228 = vmatpush1.msra.mxu0 0.0
      %1229 = vmatprep.subr.mxu0 0.0
      %1230 = vmatpush1.msra.mxu0 0.0
      %1231 = vmatprep.subr.mxu0 0.0
      %1232 = vmatpush1.msra.mxu0 0.0
      %1233 = vmatprep.subr.mxu0 0.0
      %1234 = vmatpush1.msra.mxu0 0.0
      %1235 = vmatprep.subr.mxu0 0.0
      %1236 = vmatpush1.msra.mxu0 0.0
      %1237 = vmatprep.subr.mxu0 0.0
      %1238 = vmatpush1.msra.mxu0 0.0
      %1239 = vmatprep.subr.mxu0 0.0
      %1240 = vmatpush1.msra.mxu0 0.0
      %1241 = vmatprep.subr.mxu0 0.0
      %1242 = vmatpush1.msra.mxu0 0.0
      %1243 = vmatprep.mubr.f32.mxu0 0.0
      %1244 = vmatmul.mubr.f32.gmra.mrb[0].mxu0 %v1174
      %v1245 = vpop.f32.mrb[0].mxu0
      %v1246 = vadd.f32 %v1166, %v1245
      %v1247 = vpop.f32.mrb[0].mxu0
      %v1248 = vadd.f32 %v1166, %v1247
      %1249 = vmatprep.mubr.f32.mxu0 0.0
      %1250 = vmatmul.mubr.f32.gmra.mrb[0].mxu0 %v1177
      %v1251 = vpop.f32.mrb[0].mxu0
      %v1252 = vadd.f32 %v1171, %v1251
      %v1253 = vpop.f32.mrb[0].mxu0
      %v1254 = vadd.f32 %v1171, %v1253
      %1255 = vdwg.mxu0
      %vm1256 = vcmp.gt.f32.partialorder %v1246, 0.0
      %vm1257 = vcmp.gt.f32.partialorder %v1248, 0.0
      %vm1258 = vcmp.gt.f32.partialorder %v1252, 0.0
      %vm1259 = vcmp.gt.f32.partialorder %v1254, 0.0
      %v1260 = vmul.f32 %v1246, 0.01
      %v1261 = vmul.f32 %v1248, 0.01
      %v1262 = vmul.f32 %v1252, 0.01
      %v1263 = vmul.f32 %v1254, 0.01
      %v1264 = vsel %vm1256, %v1246, %v1260
      %v1265 = vsel %vm1257, %v1248, %v1261
      %v1266 = vsel %vm1258, %v1252, %v1262
      %v1267 = vsel %vm1259, %v1254, %v1263
      %1272 = vrot.lane.b32.xlu0 %v1264, 8
      %v1273 = vpop.permute.xlu0 %1272
      %1274 = vrot.lane.b32.xlu0 %v1265, 8
      %v1275 = vpop.permute.xlu0 %1274
      %1276 = vrot.lane.b32.xlu0 %v1266, 8
      %v1277 = vpop.permute.xlu0 %1276
      %1278 = vrot.lane.b32.xlu0 %v1267, 8
      %v1279 = vpop.permute.xlu0 %1278
      %v1280 = vsel %vm1132, %v1273, %v1275
      %v1281 = vsel %vm1132, %v1277, %v1279
      %v1286 = vsel %vm1132, 0.0, %v1273
      %v1287 = vsel %vm1132, 0.0, %v1277
      %1290 = vrot.lane.b32.xlu0 %v1286, 124
      %v1291 = vpop.permute.xlu0 %1290
      %1292 = vrot.lane.b32.xlu0 %v1280, 124
      %v1293 = vpop.permute.xlu0 %1292
      %1294 = vrot.lane.b32.xlu0 %v1275, 124
      %v1295 = vpop.permute.xlu0 %1294
      %1296 = vrot.lane.b32.xlu0 %v1287, 124
      %v1297 = vpop.permute.xlu0 %1296
      %1298 = vrot.lane.b32.xlu0 %v1281, 124
      %v1299 = vpop.permute.xlu0 %1298
      %1300 = vrot.lane.b32.xlu0 %v1279, 124
      %v1301 = vpop.permute.xlu0 %1300
      %v1302 = vsel %vm914, %v1291, %v1293
      %v1303 = vsel %vm914, %v1293, %v1295
      %v1304 = vsel %vm914, %v1297, %v1299
      %v1305 = vsel %vm914, %v1299, %v1301
      %1310 = vrot.lane.b32.xlu0 %v1286, 120
      %v1311 = vpop.permute.xlu0 %1310
      %1312 = vrot.lane.b32.xlu0 %v1280, 120
      %v1313 = vpop.permute.xlu0 %1312
      %1314 = vrot.lane.b32.xlu0 %v1275, 120
      %v1315 = vpop.permute.xlu0 %1314
      %1316 = vrot.lane.b32.xlu0 %v1287, 120
      %v1317 = vpop.permute.xlu0 %1316
      %1318 = vrot.lane.b32.xlu0 %v1281, 120
      %v1319 = vpop.permute.xlu0 %1318
      %1320 = vrot.lane.b32.xlu0 %v1279, 120
      %v1321 = vpop.permute.xlu0 %1320
      %v1322 = vsel %vm1154, %v1311, %v1313
      %v1323 = vsel %vm1154, %v1313, %v1315
      %v1324 = vsel %vm1154, %v1317, %v1319
      %v1325 = vsel %vm1154, %v1319, %v1321
      %v1330 = vld [vmem:[%s13] sm:$0xff]
      %v1331 = vld [vmem:[%s13 + $0x8] sm:$0xff]
      %v1332 = vld [vmem:[%s14] sm:$0xff]
      %v1333 = vld [vmem:[%s14 + $0x8] sm:$0xff]
      %1335 = vset.pattern.permute.xlu0 0
      %1336 = vperm.xlu0 %1335, %v1332
      %v1337 = vpop.permute.xlu0 %1336
      %1340 = vset.pattern.permute.xlu0 0
      %1341 = vperm.xlu0 %1340, %v1333
      %v1342 = vpop.permute.xlu0 %1341
      %vm1344 = vcmask 392192
      %v1346 = vsel %vm1344, %v1330, 0
      %v1349 = vsel %vm1344, %v1331, 0
      %1351 = vmatprep.subr.mxu0 %v1280
      %1352 = vmatpush1.msra.mxu0 %v1286
      %1353 = vmatprep.subr.mxu0 %v1281
      %1354 = vmatpush1.msra.mxu0 %v1287
      %1355 = vmatprep.subr.mxu0 %v1303
      %1356 = vmatpush1.msra.mxu0 %v1302
      %1357 = vmatprep.subr.mxu0 %v1305
      %1358 = vmatpush1.msra.mxu0 %v1304
      %1359 = vmatprep.subr.mxu0 %v1323
      %1360 = vmatpush1.msra.mxu0 %v1322
      %1361 = vmatprep.subr.mxu0 %v1325
      %1362 = vmatpush1.msra.mxu0 %v1324
      %1363 = vmatprep.subr.mxu0 0.0
      %1364 = vmatpush1.msra.mxu0 0.0
      %1365 = vmatprep.subr.mxu0 0.0
      %1366 = vmatpush1.msra.mxu0 0.0
      %1367 = vmatprep.subr.mxu0 0.0
      %1368 = vmatpush1.msra.mxu0 0.0
      %1369 = vmatprep.subr.mxu0 0.0
      %1370 = vmatpush1.msra.mxu0 0.0
      %1371 = vmatprep.subr.mxu0 0.0
      %1372 = vmatpush1.msra.mxu0 0.0
      %1373 = vmatprep.subr.mxu0 0.0
      %1374 = vmatpush1.msra.mxu0 0.0
      %1375 = vmatprep.subr.mxu0 0.0
      %1376 = vmatpush1.msra.mxu0 0.0
      %1377 = vmatprep.subr.mxu0 0.0
      %1378 = vmatpush1.msra.mxu0 0.0
      %1379 = vmatprep.subr.mxu0 0.0
      %1380 = vmatpush1.msra.mxu0 0.0
      %1381 = vmatprep.subr.mxu0 0.0
      %1382 = vmatpush1.msra.mxu0 0.0
      %1383 = vmatprep.subr.mxu0 0.0
      %1384 = vmatpush1.msra.mxu0 0.0
      %1385 = vmatprep.subr.mxu0 0.0
      %1386 = vmatpush1.msra.mxu0 0.0
      %1387 = vmatprep.subr.mxu0 0.0
      %1388 = vmatpush1.msra.mxu0 0.0
      %1389 = vmatprep.subr.mxu0 0.0
      %1390 = vmatpush1.msra.mxu0 0.0
      %1391 = vmatprep.subr.mxu0 0.0
      %1392 = vmatpush1.msra.mxu0 0.0
      %1393 = vmatprep.subr.mxu0 0.0
      %1394 = vmatpush1.msra.mxu0 0.0
      %1395 = vmatprep.subr.mxu0 0.0
      %1396 = vmatpush1.msra.mxu0 0.0
      %1397 = vmatprep.subr.mxu0 0.0
      %1398 = vmatpush1.msra.mxu0 0.0
      %1399 = vmatprep.subr.mxu0 0.0
      %1400 = vmatpush1.msra.mxu0 0.0
      %1401 = vmatprep.subr.mxu0 0.0
      %1402 = vmatpush1.msra.mxu0 0.0
      %1403 = vmatprep.subr.mxu0 0.0
      %1404 = vmatpush1.msra.mxu0 0.0
      %1405 = vmatprep.subr.mxu0 0.0
      %1406 = vmatpush1.msra.mxu0 0.0
      %1407 = vmatprep.subr.mxu0 0.0
      %1408 = vmatpush1.msra.mxu0 0.0
      %1409 = vmatprep.subr.mxu0 0.0
      %1410 = vmatpush1.msra.mxu0 0.0
      %1411 = vmatprep.subr.mxu0 0.0
      %1412 = vmatpush1.msra.mxu0 0.0
      %1413 = vmatprep.subr.mxu0 0.0
      %1414 = vmatpush1.msra.mxu0 0.0
      %1415 = vmatprep.mubr.f32.mxu0 0.0
      %1416 = vmatmul.mubr.f32.gmra.mrb[0].mxu0 %v1346
      %v1417 = vpop.f32.mrb[0].mxu0
      %v1418 = vadd.f32 %v1337, %v1417
      %v1419 = vpop.f32.mrb[0].mxu0
      %v1420 = vadd.f32 %v1337, %v1419
      %1421 = vmatprep.mubr.f32.mxu0 0.0
      %1422 = vmatmul.mubr.f32.gmra.mrb[0].mxu0 %v1349
      %v1423 = vpop.f32.mrb[0].mxu0
      %v1424 = vadd.f32 %v1342, %v1423
      %v1425 = vpop.f32.mrb[0].mxu0
      %v1426 = vadd.f32 %v1342, %v1425
      %1427 = vdwg.mxu0
      %vm1428 = vcmp.gt.f32.partialorder %v1418, 0.0
      %vm1429 = vcmp.gt.f32.partialorder %v1420, 0.0
      %vm1430 = vcmp.gt.f32.partialorder %v1424, 0.0
      %vm1431 = vcmp.gt.f32.partialorder %v1426, 0.0
      %v1432 = vmul.f32 %v1418, 0.01
      %v1433 = vmul.f32 %v1420, 0.01
      %v1434 = vmul.f32 %v1424, 0.01
      %v1435 = vmul.f32 %v1426, 0.01
      %v1436 = vsel %vm1428, %v1418, %v1432
      %v1437 = vsel %vm1429, %v1420, %v1433
      %v1438 = vsel %vm1430, %v1424, %v1434
      %v1439 = vsel %vm1431, %v1426, %v1435
      %v1440 = vld [vmem:[%s15] sm:$0xff]
      %v1441 = vld [vmem:[%s15 + $0x8] sm:$0xff]
      %v1442 = vld [vmem:[%s16] sm:$0xff]
      %v1443 = vld [vmem:[%s16 + $0x8] sm:$0xff]
      %1445 = vset.pattern.permute.xlu0 0
      %1446 = vperm.xlu0 %1445, %v1442
      %v1447 = vpop.permute.xlu0 %1446
      %1450 = vset.pattern.permute.xlu0 0
      %1451 = vperm.xlu0 %1450, %v1443
      %v1452 = vpop.permute.xlu0 %1451
      %v1455 = vsel %vm1132, %v1440, 0
      %v1458 = vsel %vm1132, %v1441, 0
      %1460 = vmatprep.subr.mxu0 %v1125
      %1461 = vmatpush1.msra.mxu0 %v1124
      %1462 = vmatprep.subr.mxu0 0.0
      %1463 = vmatpush1.msra.mxu0 0.0
      %1464 = vmatprep.subr.mxu0 0.0
      %1465 = vmatpush1.msra.mxu0 0.0
      %1466 = vmatprep.subr.mxu0 0.0
      %1467 = vmatpush1.msra.mxu0 0.0
      %1468 = vmatprep.subr.mxu0 0.0
      %1469 = vmatpush1.msra.mxu0 0.0
      %1470 = vmatprep.subr.mxu0 0.0
      %1471 = vmatpush1.msra.mxu0 0.0
      %1472 = vmatprep.subr.mxu0 0.0
      %1473 = vmatpush1.msra.mxu0 0.0
      %1474 = vmatprep.subr.mxu0 0.0
      %1475 = vmatpush1.msra.mxu0 0.0
      %1476 = vmatprep.subr.mxu0 0.0
      %1477 = vmatpush1.msra.mxu0 0.0
      %1478 = vmatprep.subr.mxu0 0.0
      %1479 = vmatpush1.msra.mxu0 0.0
      %1480 = vmatprep.subr.mxu0 0.0
      %1481 = vmatpush1.msra.mxu0 0.0
      %1482 = vmatprep.subr.mxu0 0.0
      %1483 = vmatpush1.msra.mxu0 0.0
      %1484 = vmatprep.subr.mxu0 0.0
      %1485 = vmatpush1.msra.mxu0 0.0
      %1486 = vmatprep.subr.mxu0 0.0
      %1487 = vmatpush1.msra.mxu0 0.0
      %1488 = vmatprep.subr.mxu0 0.0
      %1489 = vmatpush1.msra.mxu0 0.0
      %1490 = vmatprep.subr.mxu0 0.0
      %1491 = vmatpush1.msra.mxu0 0.0
      %1492 = vmatprep.subr.mxu0 0.0
      %1493 = vmatpush1.msra.mxu0 0.0
      %1494 = vmatprep.subr.mxu0 0.0
      %1495 = vmatpush1.msra.mxu0 0.0
      %1496 = vmatprep.subr.mxu0 0.0
      %1497 = vmatpush1.msra.mxu0 0.0
      %1498 = vmatprep.subr.mxu0 0.0
      %1499 = vmatpush1.msra.mxu0 0.0
      %1500 = vmatprep.subr.mxu0 0.0
      %1501 = vmatpush1.msra.mxu0 0.0
      %1502 = vmatprep.subr.mxu0 0.0
      %1503 = vmatpush1.msra.mxu0 0.0
      %1504 = vmatprep.subr.mxu0 0.0
      %1505 = vmatpush1.msra.mxu0 0.0
      %1506 = vmatprep.subr.mxu0 0.0
      %1507 = vmatpush1.msra.mxu0 0.0
      %1508 = vmatprep.subr.mxu0 0.0
      %1509 = vmatpush1.msra.mxu0 0.0
      %1510 = vmatprep.subr.mxu0 0.0
      %1511 = vmatpush1.msra.mxu0 0.0
      %1512 = vmatprep.subr.mxu0 0.0
      %1513 = vmatpush1.msra.mxu0 0.0
      %1514 = vmatprep.subr.mxu0 0.0
      %1515 = vmatpush1.msra.mxu0 0.0
      %1516 = vmatprep.subr.mxu0 0.0
      %1517 = vmatpush1.msra.mxu0 0.0
      %1518 = vmatprep.subr.mxu0 0.0
      %1519 = vmatpush1.msra.mxu0 0.0
      %1520 = vmatprep.subr.mxu0 0.0
      %1521 = vmatpush1.msra.mxu0 0.0
      %1522 = vmatprep.subr.mxu0 0.0
      %1523 = vmatpush1.msra.mxu0 0.0
      %1524 = vmatprep.mubr.f32.mxu0 0.0
      %1525 = vmatmul.mubr.f32.gmra.mrb[0].mxu0 %v1455
      %v1526 = vpop.f32.mrb[0].mxu0
      %v1527 = vadd.f32 %v1447, %v1526
      %v1528 = vpop.f32.mrb[0].mxu0
      %v1529 = vadd.f32 %v1447, %v1528
      %1530 = vmatprep.mubr.f32.mxu0 0.0
      %1531 = vmatmul.mubr.f32.gmra.mrb[0].mxu0 %v1458
      %v1532 = vpop.f32.mrb[0].mxu0
      %v1533 = vadd.f32 %v1452, %v1532
      %v1534 = vpop.f32.mrb[0].mxu0
      %v1535 = vadd.f32 %v1452, %v1534
      %1536 = vdwg.mxu0
      %v1537 = vadd.f32 %v1436, %v1527
      %v1538 = vadd.f32 %v1437, %v1529
      %v1539 = vadd.f32 %v1438, %v1533
      %v1540 = vadd.f32 %v1439, %v1535
      %v1541 = vmax.f32 %v1537, %v1538
      %1542 = vmax.xlane.f32.xlu0 %v1541
      %v1543 = vpop.xlane.xlu0 %1542
      %v1544 = vmax.f32 %v1539, %v1540
      %1545 = vmax.xlane.f32.xlu0 %v1544
      %v1546 = vpop.xlane.xlu0 %1545
      %vm1547 = vcmask 7168
      %1548 = vst.msk [vmem:[%s548] sm:$0xff] %vm1547, %v1543
      %1549 = vst.msk [vmem:[%s548 + $0x8] sm:$0xff] %vm1547, %v1546
      %p1550 = scmp.lt.s32.totalorder %s28, 1
      %s1551 = scalar_select %p1550, %s28, 1
      %s1552 = smul.addr %s1551, 2
      %s1553 = smul.addr %s1552, 8
      %s1554 = scalar_lea.vmem %s17, %s1553
      // Predicated region
      $region89: #{tpu_custom_call.1} parent=87 // pred_check
        %p1555 = pneg %p408
      $region90: #{tpu_custom_call.1} parent=87 // pred_check_branch
        %1557 = sbr.rel (%p1555) target = $region92
      $region91: #{tpu_custom_call.1} parent=87 // pred_region
        _
      $region92: #{tpu_custom_call.1} parent=87 // pred_fallthru
        _
    $region88: #{tpu_custom_call.1} parent=5 // pred_fallthru
      _
    %p1558 = scmp.le.s32.totalorder 2, %s23
    // Predicated region
    $region93: #{tpu_custom_call.1} parent=5 // pred_check
      %p1559 = pneg %p1558
    $region94: #{tpu_custom_call.1} parent=5 // pred_check_branch
      %1561 = sbr.rel (%p1559) target = $region96
    $region95: #{tpu_custom_call.1} parent=5 // pred_region
      %s1562 = ssub.s32 %s23, 2
      // Predicated region
      $region97: #{tpu_custom_call.1} parent=95 // pred_check
        %p1563 = pneg %p414
      $region98: #{tpu_custom_call.1} parent=95 // pred_check_branch
        %1565 = sbr.rel (%p1563) target = $region100
      $region99: #{tpu_custom_call.1} parent=95 // pred_region
        %p1566 = scmp.lt.s32.totalorder %s29, 1
        %s1567 = scalar_select %p1566, %s29, 1
        %s1568 = smul.addr %s1567, 2
        %s1569 = smul.addr %s1568, 8
        %s1570 = scalar_lea.vmem %s17, %s1569
      $region100: #{tpu_custom_call.1} parent=95 // pred_fallthru
        _
    $region96: #{tpu_custom_call.1} parent=5 // pred_fallthru
      _
  $region6: #{tpu_custom_call.1} parent=0 // loop_footer
    %s27 = sadd.s32 1, %s23
  $region7: #{tpu_custom_call.1} parent=0 // loop_footer_branch
    %22 = sbr.rel target = $region3
  $region8: #{tpu_custom_call.1} parent=0 // loop_exit
    _

</llo_original>
